<compile_context>
chip_gen: v6e
topology: v6e:2x2x1
jax: 0.10.0
libtpu: 0.0.40
codegen_flags: <defaults>
</compile_context>

<pallas_src>
import functools

import jax
import jax.numpy as jnp
from jax.experimental import pallas as pl
from jax.experimental.pallas import tpu as pltpu


def _round_up(x, m):
    return (x + m - 1) // m * m


# ---------------------------------------------------------------------------
# Kernel
# ---------------------------------------------------------------------------
def _fused_gcn_kernel(x_ref, adj_ref, w1_ref, b1_ref, w2_ref, b2_ref,
                      o_ref, s1_ref, s2_ref, *, tm, nclass, compute_dtype):
    p = pl.program_id(0)                       # phase
    i = pl.program_id(1)                       # node-row tile
    row0 = pl.multiple_of(i * tm, tm)
    cd = compute_dtype

    # phase 0: S1[rows i] = X[rows i] @ W1fold   (AWP delta already folded in wrapper)
    @pl.when(p == 0)
    def _():
        s1_ref[pl.ds(row0, tm), :] = jnp.dot(
            x_ref[...], w1_ref[...],
            preferred_element_type=jnp.float32).astype(cd)

    # phase 1: S2[rows i] = relu(A[rows i, :] @ S1 + b1) @ W2
    # (layer-1 output H never leaves this grid step; no H scratch buffer)
    @pl.when(p == 1)
    def _():
        agg = jnp.dot(adj_ref[...], s1_ref[...],
                      preferred_element_type=jnp.float32)
        h = jnp.maximum(agg + b1_ref[...], 0.0).astype(cd)
        # TODO(synk): F.dropout(h, p, training=self.training) — identity in eval mode, omitted.
        s2_ref[pl.ds(row0, tm), :] = jnp.dot(
            h, w2_ref[...], preferred_element_type=jnp.float32).astype(cd)

    # phase 2: OUT[rows i] = log_softmax(A[rows i, :] @ S2 + b2) over real classes
    @pl.when(p == 2)
    def _():
        logits = jnp.dot(adj_ref[...], s2_ref[...],
                         preferred_element_type=jnp.float32) + b2_ref[...]
        # Mask padded class lanes so they don't perturb max / sum (Python literal,
        # NOT a module-level jnp constant — avoids the captured-constant error).
        col = jax.lax.broadcasted_iota(jnp.int32, logits.shape, 1)
        logits = jnp.where(col < nclass, logits, -1e30)
        m = jnp.max(logits, axis=1, keepdims=True)
        s = logits - m
        lse = jnp.log(jnp.sum(jnp.exp(s), axis=1, keepdims=True))
        o_ref[...] = (s - lse).astype(o_ref.dtype)


# ---------------------------------------------------------------------------
# One-time (cacheable) padding / param folding — keep OUT of the hot path.
# ---------------------------------------------------------------------------
def pad_graph(x, adj, *, tm, compute_dtype):
    """Zero-pad X/adj to lane-dense shapes and cast to compute_dtype ONCE."""
    n, nfeat = x.shape
    f_pad = _round_up(nfeat, 128)
    n_pad = _round_up(n, tm)
    xp = jnp.zeros((n_pad, f_pad), compute_dtype).at[:n, :nfeat].set(
        x.astype(compute_dtype))
    adjp = jnp.zeros((n_pad, n_pad), compute_dtype).at[:n, :n].set(
        adj.astype(compute_dtype))
    return xp, adjp


def fold_and_pad_params(params, *, compute_dtype):
    """Fold W1 + W1_delta once and zero-pad all params to lane-dense shapes."""
    nfeat, nhid = params["w1"].shape
    nclass = params["w2"].shape[1]
    f_pad = _round_up(nfeat, 128)
    h_pad = _round_up(nhid, 128)
    c_pad = _round_up(nclass, 128)
    w1_fold = (params["w1"] + params["w1_delta"]).astype(compute_dtype)
    w1p = jnp.zeros((f_pad, h_pad), compute_dtype).at[:nfeat, :nhid].set(w1_fold)
    b1p = jnp.zeros((1, h_pad), jnp.float32).at[0, :nhid].set(params["b1"])
    w2p = jnp.zeros((h_pad, c_pad), compute_dtype).at[:nhid, :nclass].set(
        params["w2"].astype(compute_dtype))
    b2p = jnp.zeros((1, c_pad), jnp.float32).at[0, :nclass].set(params["b2"])
    return w1p, b1p, w2p, b2p


def _vmem_footprint(tm, n_pad, f_pad, h_pad, c_pad, cbytes):
    """Rough VMEM footprint (double-buffered streamed inputs + scratch + consts)."""
    return (2 * tm * n_pad * cbytes           # adj row slab (double-buffered)
            + 2 * tm * f_pad * cbytes         # X row slab (double-buffered)
            + 2 * tm * c_pad * 4              # output row slab (f32, double-buffered)
            + n_pad * (h_pad + c_pad) * cbytes  # S1 + S2 scratch (compute_dtype)
            + 2 * (f_pad * h_pad + h_pad * c_pad) * cbytes  # W1, W2 (double-buffered)
            + 2 * (h_pad + c_pad) * 4)        # b1, b2


def pick_tm(n, nfeat, nhid, nclass, *, compute_dtype,
            vmem_budget_bytes=48 * 1024 * 1024):
    """Largest row tile (multiple of 128) whose footprint fits the VMEM budget.

    Default budget is conservative for v7x (64 MiB VMEM). On v5e/v6e raise the
    budget toward ~96 MiB to get tm=512 at Cora scale.
    """
    f_pad = _round_up(nfeat, 128)
    h_pad = _round_up(nhid, 128)
    c_pad = _round_up(nclass, 128)
    cbytes = jnp.dtype(compute_dtype).itemsize
    n_cap = _round_up(n, 128)
    for tm in (512, 256, 128):
        tm_eff = min(tm, n_cap)
        n_pad = _round_up(n, tm_eff)
        if _vmem_footprint(tm_eff, n_pad, f_pad, h_pad, c_pad, cbytes) <= vmem_budget_bytes:
            return tm_eff
    return min(128, n_cap)


# ---------------------------------------------------------------------------
# Hot-path forward on pre-padded inputs (single fused pallas_call).
# ---------------------------------------------------------------------------
def gcn_forward_padded(xp, adjp, w1p, b1p, w2p, b2p, *, n, nclass, tm,
                       vmem_limit_bytes=56 * 1024 * 1024):
    n_pad, f_pad = xp.shape
    h_pad = w1p.shape[1]
    c_pad = w2p.shape[1]
    assert adjp.shape == (n_pad, n_pad)
    assert n_pad % tm == 0
    nr = n_pad // tm
    compute_dtype = xp.dtype
    cbytes = jnp.dtype(compute_dtype).itemsize

    # Explicit VMEM size check (v7x has only 64 MiB of VMEM per TensorCore).
    footprint = _vmem_footprint(tm, n_pad, f_pad, h_pad, c_pad, cbytes)
    assert footprint <= vmem_limit_bytes, (
        f"VMEM footprint {footprint} exceeds limit {vmem_limit_bytes}; lower tm")

    # Index maps: pin arrays to the right block in phases that don't read them so
    # no wasted DMA is issued at phase boundaries.
    def x_map(p, i):       # read only in phase 0; afterwards pin to last-loaded block
        return (jnp.where(p == 0, i, nr - 1), 0)

    def adj_map(p, i):     # read in phases 1 & 2; phase 0 pre-stages block 0
        return (jnp.where(p == 0, 0, i), 0)

    def const_map(p, i):   # weights / biases: resident, loaded once
        return (0, 0)

    def out_map(p, i):     # written only in phase 2; hold index 0 until then
        return (jnp.where(p == 2, i, 0), 0)

    kernel = functools.partial(_fused_gcn_kernel, tm=tm, nclass=nclass,
                               compute_dtype=compute_dtype)

    out_padded = pl.pallas_call(
        kernel,
        out_shape=jax.ShapeDtypeStruct((n_pad, c_pad), jnp.float32),
        grid_spec=pltpu.PrefetchScalarGridSpec(
            num_scalar_prefetch=0,
            grid=(3, nr),                                   # (phase, row tile)
            in_specs=[
                pl.BlockSpec((tm, f_pad), x_map),           # X
                pl.BlockSpec((tm, n_pad), adj_map),         # A (row slab)
                pl.BlockSpec((f_pad, h_pad), const_map),    # W1 + W1_delta (folded)
                pl.BlockSpec((1, h_pad), const_map),        # b1
                pl.BlockSpec((h_pad, c_pad), const_map),    # W2
                pl.BlockSpec((1, c_pad), const_map),        # b2
            ],
            out_specs=pl.BlockSpec((tm, c_pad), out_map),
            scratch_shapes=[
                pltpu.VMEM((n_pad, h_pad), compute_dtype),  # S1 = X @ W1fold
                pltpu.VMEM((n_pad, c_pad), compute_dtype),  # S2 = relu(A@S1+b1) @ W2
            ]),
        compiler_params=pltpu.CompilerParams(
            # Row axis must stay "arbitrary": all row tiles share the VMEM
            # scratch intermediates across phases.
            dimension_semantics=("arbitrary", "arbitrary"),
            vmem_limit_bytes=vmem_limit_bytes),
    )(xp, adjp, w1p, b1p, w2p, b2p)

    return out_padded[:n, :nclass]


# ---------------------------------------------------------------------------
# Convenience wrapper (pads every call — fine for one-off use; for repeated
# forwards, call pad_graph / fold_and_pad_params once and use gcn_forward_padded).
# ---------------------------------------------------------------------------
def gcn_forward(x, adj, params, *, compute_dtype=jnp.bfloat16, tm=None,
                vmem_budget_bytes=48 * 1024 * 1024,
                vmem_limit_bytes=56 * 1024 * 1024):
    n, nfeat = x.shape
    nhid = params["w1"].shape[1]
    nclass = params["w2"].shape[1]
    if tm is None:
        tm = pick_tm(n, nfeat, nhid, nclass, compute_dtype=compute_dtype,
                     vmem_budget_bytes=vmem_budget_bytes)
    xp, adjp = pad_graph(x, adj, tm=tm, compute_dtype=compute_dtype)
    w1p, b1p, w2p, b2p = fold_and_pad_params(params, compute_dtype=compute_dtype)
    return gcn_forward_padded(xp, adjp, w1p, b1p, w2p, b2p, n=n, nclass=nclass,
                              tm=tm, vmem_limit_bytes=vmem_limit_bytes)


def init_params(key, nfeat, nhid, nclass):
    """Matches GraphConvolution.reset_parameters: uniform(-stdv, stdv), stdv=1/sqrt(out)."""
    k1, k2, k3, k4 = jax.random.split(key, 4)
    stdv1 = 1.0 / (nhid ** 0.5)
    stdv2 = 1.0 / (nclass ** 0.5)
    return {
        "w1": jax.random.uniform(k1, (nfeat, nhid), jnp.float32, -stdv1, stdv1),
        "w1_delta": jnp.zeros((nfeat, nhid), jnp.float32),  # zeroed, requires_grad=False
        "b1": jax.random.uniform(k2, (nhid,), jnp.float32, -stdv1, stdv1),
        "w2": jax.random.uniform(k3, (nhid, nclass), jnp.float32, -stdv2, stdv2),
        "b2": jax.random.uniform(k4, (nclass,), jnp.float32, -stdv2, stdv2),
    }


def _reference_forward(x, adj, params):
    """Pure-JAX reference for correctness check."""
    w1 = params["w1"] + params["w1_delta"]
    h = jax.nn.relu(adj @ (x @ w1) + params["b1"])
    logits = adj @ (h @ params["w2"]) + params["b2"]
    return jax.nn.log_softmax(logits, axis=1)


if __name__ == "__main__":
    key = jax.random.PRNGKey(0)
    kx, ka, kp = jax.random.split(key, 3)

    N, NFEAT, NHID, NCLASS = 64, 32, 16, 8

    x = jax.random.normal(kx, (N, NFEAT), jnp.float32)

    # Symmetric row-normalized dense adjacency (stand-in for normalize_adj_tensor).
    a = (jax.random.uniform(ka, (N, N)) > 0.8).astype(jnp.float32)
    a = jnp.maximum(a, a.T) + jnp.eye(N, dtype=jnp.float32)
    deg = jnp.sum(a, axis=1)
    d_inv_sqrt = 1.0 / jnp.sqrt(deg)
    adj = a * d_inv_sqrt[:, None] * d_inv_sqrt[None, :]

    params = init_params(kp, NFEAT, NHID, NCLASS)
    ref = _reference_forward(x, adj, params)

    # 1) f32 compute path: must match the PyTorch f32 semantics tightly.
    out_f32 = gcn_forward(x, adj, params, compute_dtype=jnp.float32)
    out_f32 = jax.block_until_ready(out_f32)
    assert out_f32.shape == (N, NCLASS)
    assert jnp.allclose(out_f32, ref, atol=1e-4, rtol=1e-4), "f32 mismatch vs reference"

    # 2) Default bf16 inference path via the cached / pre-padded hot path
    #    (adj streamed in bf16, f32 MXU accumulation) — loose tolerance.
    cd = jnp.bfloat16
    tm = pick_tm(N, NFEAT, NHID, NCLASS, compute_dtype=cd)
    xp, adjp = pad_graph(x, adj, tm=tm, compute_dtype=cd)           # pad/cast ONCE
    w1p, b1p, w2p, b2p = fold_and_pad_params(params, compute_dtype=cd)
    out_bf16 = gcn_forward_padded(xp, adjp, w1p, b1p, w2p, b2p,
                                  n=N, nclass=NCLASS, tm=tm)
    out_bf16 = jax.block_until_ready(out_bf16)
    assert out_bf16.shape == (N, NCLASS)
    assert jnp.allclose(out_bf16, ref, atol=1e-1, rtol=1e-1), "bf16 mismatch vs reference"

    print("KERNEL_OK")
</pallas_src>

<mosaic_0001>
module attributes {stable_mosaic.version = 11 : i64} {
  func.func @_fused_gcn_kernel(%arg0: i32, %arg1: i32, %arg2: memref<128x128xf32, #tpu.memory_space<vmem>>, %arg3: memref<128x128xf32, #tpu.memory_space<vmem>>, %arg4: memref<128x128xf32, #tpu.memory_space<vmem>>, %arg5: memref<1x128xf32, #tpu.memory_space<vmem>>, %arg6: memref<128x128xf32, #tpu.memory_space<vmem>>, %arg7: memref<1x128xf32, #tpu.memory_space<vmem>>, %arg8: memref<128x128xf32, #tpu.memory_space<vmem>>, %arg9: memref<128x128xf32, #tpu.memory_space<vmem>>, %arg10: memref<128x128xf32, #tpu.memory_space<vmem>>) attributes {dimension_semantics = [#tpu.dimension_semantics<arbitrary>, #tpu.dimension_semantics<arbitrary>], iteration_bounds = array<i64: 3, 1>, scalar_prefetch = 0 : i64, scratch_operands = 2 : i64, tpu.core_type = #tpu.core_type<tc>, window_params = [{transform_indices = @transform_0, window_bounds = array<i64: 128, 128>}, {transform_indices = @transform_1, window_bounds = array<i64: 128, 128>}, {pipeline_mode = #tpu.pipeline_mode<synchronous>, transform_indices = @transform_2, window_bounds = array<i64: 128, 128>}, {pipeline_mode = #tpu.pipeline_mode<synchronous>, transform_indices = @transform_3, window_bounds = array<i64: 1, 128>}, {pipeline_mode = #tpu.pipeline_mode<synchronous>, transform_indices = @transform_4, window_bounds = array<i64: 128, 128>}, {pipeline_mode = #tpu.pipeline_mode<synchronous>, transform_indices = @transform_5, window_bounds = array<i64: 1, 128>}, {transform_indices = @transform_6, window_bounds = array<i64: 128, 128>}]} {
    %c128_i32 = arith.constant 128 : i32
    %0 = arith.muli %arg1, %c128_i32 : i32
    %1 = tpu.assume_multiple %0, 128 : i32
    %c0_i32 = arith.constant 0 : i32
    %2 = arith.cmpi eq, %arg0, %c0_i32 : i32
    %3 = arith.extui %2 : i1 to i32
    %c0_i32_0 = arith.constant 0 : i32
    %4 = arith.cmpi ne, %3, %c0_i32_0 : i32
    scf.if %4 {
      %c0 = arith.constant 0 : index
      %c0_3 = arith.constant 0 : index
      %11 = vector.load %arg2[%c0, %c0_3] : memref<128x128xf32, #tpu.memory_space<vmem>>, vector<128x128xf32>
      %c0_4 = arith.constant 0 : index
      %c0_5 = arith.constant 0 : index
      %12 = vector.load %arg4[%c0_4, %c0_5] : memref<128x128xf32, #tpu.memory_space<vmem>>, vector<128x128xf32>
      %cst = arith.constant dense<0.000000e+00> : vector<128x128xf32>
      %13 = tpu.matmul %11, %12, %cst {dimension_numbers = #tpu.dot_dimension_numbers<[1], [0], [0], [1], [0, 0, 1, 1], [], []>} : vector<128x128xf32>, vector<128x128xf32>, vector<128x128xf32> -> vector<128x128xf32>
      %14 = arith.index_cast %1 : i32 to index
      %c0_6 = arith.constant 0 : index
      %15 = vector.load %arg9[%14, %c0_6] : memref<128x128xf32, #tpu.memory_space<vmem>>, vector<128x128xf32>
      tpu.vector_store %arg9[%14, %c0_6], %13 {strides = array<i32>} : memref<128x128xf32, #tpu.memory_space<vmem>>, vector<128x128xf32>,
    } else {
    }
    %c1_i32 = arith.constant 1 : i32
    %5 = arith.cmpi eq, %arg0, %c1_i32 : i32
    %6 = arith.extui %5 : i1 to i32
    %c0_i32_1 = arith.constant 0 : i32
    %7 = arith.cmpi ne, %6, %c0_i32_1 : i32
    scf.if %7 {
      %c0 = arith.constant 0 : index
      %c0_3 = arith.constant 0 : index
      %11 = vector.load %arg3[%c0, %c0_3] : memref<128x128xf32, #tpu.memory_space<vmem>>, vector<128x128xf32>
      %c0_4 = arith.constant 0 : index
      %c0_5 = arith.constant 0 : index
      %12 = vector.load %arg9[%c0_4, %c0_5] : memref<128x128xf32, #tpu.memory_space<vmem>>, vector<128x128xf32>
      %cst = arith.constant dense<0.000000e+00> : vector<128x128xf32>
      %13 = tpu.matmul %11, %12, %cst {dimension_numbers = #tpu.dot_dimension_numbers<[1], [0], [0], [1], [0, 0, 1, 1], [], []>} : vector<128x128xf32>, vector<128x128xf32>, vector<128x128xf32> -> vector<128x128xf32>
      %c0_6 = arith.constant 0 : index
      %c0_7 = arith.constant 0 : index
      %14 = vector.load %arg5[%c0_6, %c0_7] : memref<1x128xf32, #tpu.memory_space<vmem>>, vector<1x128xf32>
      %15 = vector.broadcast %14 : vector<1x128xf32> to vector<128x128xf32>
      %16 = arith.addf %13, %15 : vector<128x128xf32>
      %cst_8 = arith.constant 0.000000e+00 : f32
      %17 = vector.broadcast %cst_8 : f32 to vector<128x128xf32>
      %18 = arith.maximumf %16, %17 : vector<128x128xf32>
      %c0_9 = arith.constant 0 : index
      %c0_10 = arith.constant 0 : index
      %19 = vector.load %arg6[%c0_9, %c0_10] : memref<128x128xf32, #tpu.memory_space<vmem>>, vector<128x128xf32>
      %cst_11 = arith.constant dense<0.000000e+00> : vector<128x128xf32>
      %20 = tpu.matmul %18, %19, %cst_11 {dimension_numbers = #tpu.dot_dimension_numbers<[1], [0], [0], [1], [0, 0, 1, 1], [], []>} : vector<128x128xf32>, vector<128x128xf32>, vector<128x128xf32> -> vector<128x128xf32>
      %21 = arith.index_cast %1 : i32 to index
      %c0_12 = arith.constant 0 : index
      %22 = vector.load %arg10[%21, %c0_12] : memref<128x128xf32, #tpu.memory_space<vmem>>, vector<128x128xf32>
      tpu.vector_store %arg10[%21, %c0_12], %20 {strides = array<i32>} : memref<128x128xf32, #tpu.memory_space<vmem>>, vector<128x128xf32>,
    } else {
    }
    %c2_i32 = arith.constant 2 : i32
    %8 = arith.cmpi eq, %arg0, %c2_i32 : i32
    %9 = arith.extui %8 : i1 to i32
    %c0_i32_2 = arith.constant 0 : i32
    %10 = arith.cmpi ne, %9, %c0_i32_2 : i32
    scf.if %10 {
      %c0 = arith.constant 0 : index
      %c0_3 = arith.constant 0 : index
      %11 = vector.load %arg3[%c0, %c0_3] : memref<128x128xf32, #tpu.memory_space<vmem>>, vector<128x128xf32>
      %c0_4 = arith.constant 0 : index
      %c0_5 = arith.constant 0 : index
      %12 = vector.load %arg10[%c0_4, %c0_5] : memref<128x128xf32, #tpu.memory_space<vmem>>, vector<128x128xf32>
      %cst = arith.constant dense<0.000000e+00> : vector<128x128xf32>
      %13 = tpu.matmul %11, %12, %cst {dimension_numbers = #tpu.dot_dimension_numbers<[1], [0], [0], [1], [0, 0, 1, 1], [], []>} : vector<128x128xf32>, vector<128x128xf32>, vector<128x128xf32> -> vector<128x128xf32>
      %c0_6 = arith.constant 0 : index
      %c0_7 = arith.constant 0 : index
      %14 = vector.load %arg7[%c0_6, %c0_7] : memref<1x128xf32, #tpu.memory_space<vmem>>, vector<1x128xf32>
      %15 = vector.broadcast %14 : vector<1x128xf32> to vector<128x128xf32>
      %16 = arith.addf %13, %15 : vector<128x128xf32>
      %17 = tpu.iota {dimensions = array<i32: 1>} : vector<128x128xi32>
      %c8_i32 = arith.constant 8 : i32
      %18 = vector.broadcast %c8_i32 : i32 to vector<128x128xi32>
      %19 = arith.cmpi slt, %17, %18 : vector<128x128xi32>
      %cst_8 = arith.constant -1.000000e+30 : f32
      %20 = vector.broadcast %cst_8 : f32 to vector<128x128xf32>
      %21 = arith.select %19, %16, %20 : vector<128x128xi1>, vector<128x128xf32>
      %cst_9 = arith.constant dense<0xFF800000> : vector<128xf32>
      %22 = vector.multi_reduction <maximumf>, %21, %cst_9 [1] : vector<128x128xf32> to vector<128xf32>
      %23 = vector.shape_cast %22 : vector<128xf32> to vector<128x1xf32>
      %24 = vector.broadcast %23 : vector<128x1xf32> to vector<128x128xf32>
      %25 = arith.subf %21, %24 : vector<128x128xf32>
      %26 = math.exp %25 : vector<128x128xf32>
      %cst_10 = arith.constant dense<0.000000e+00> : vector<128xf32>
      %27 = vector.multi_reduction <add>, %26, %cst_10 [1] : vector<128x128xf32> to vector<128xf32>
      %28 = vector.shape_cast %27 : vector<128xf32> to vector<128x1xf32>
      %29 = math.log %28 : vector<128x1xf32>
      %30 = vector.broadcast %29 : vector<128x1xf32> to vector<128x128xf32>
      %31 = arith.subf %25, %30 : vector<128x128xf32>
      %c0_11 = arith.constant 0 : index
      %c0_12 = arith.constant 0 : index
      %32 = vector.load %arg8[%c0_11, %c0_12] : memref<128x128xf32, #tpu.memory_space<vmem>>, vector<128x128xf32>
      tpu.vector_store %arg8[%c0_11, %c0_12], %31 {strides = array<i32>} : memref<128x128xf32, #tpu.memory_space<vmem>>, vector<128x128xf32>,
    } else {
    }
    return
  }
  func.func @transform_0(%arg0: i32, %arg1: i32) -> (i32, i32) {
    %c0_i32 = arith.constant 0 : i32
    %0 = arith.cmpi eq, %arg0, %c0_i32 : i32
    %c0_i32_0 = arith.constant 0 : i32
    %1 = arith.select %0, %arg1, %c0_i32_0 : i32
    %c0_i32_1 = arith.constant 0 : i32
    %c0_i32_2 = arith.constant 0 : i32
    return %1, %c0_i32_1 : i32, i32
  }
  func.func @transform_1(%arg0: i32, %arg1: i32) -> (i32, i32) {
    %c0_i32 = arith.constant 0 : i32
    %0 = arith.cmpi eq, %arg0, %c0_i32 : i32
    %c0_i32_0 = arith.constant 0 : i32
    %1 = arith.select %0, %c0_i32_0, %arg1 : i32
    %c0_i32_1 = arith.constant 0 : i32
    %c0_i32_2 = arith.constant 0 : i32
    return %1, %c0_i32_1 : i32, i32
  }
  func.func @transform_2(%arg0: i32, %arg1: i32) -> (i32, i32) {
    %c0_i32 = arith.constant 0 : i32
    %c0_i32_0 = arith.constant 0 : i32
    %c0_i32_1 = arith.constant 0 : i32
    return %c0_i32, %c0_i32_0 : i32, i32
  }
  func.func @transform_3(%arg0: i32, %arg1: i32) -> (i32, i32) {
    %c0_i32 = arith.constant 0 : i32
    %c0_i32_0 = arith.constant 0 : i32
    %c0_i32_1 = arith.constant 0 : i32
    return %c0_i32, %c0_i32_0 : i32, i32
  }
  func.func @transform_4(%arg0: i32, %arg1: i32) -> (i32, i32) {
    %c0_i32 = arith.constant 0 : i32
    %c0_i32_0 = arith.constant 0 : i32
    %c0_i32_1 = arith.constant 0 : i32
    return %c0_i32, %c0_i32_0 : i32, i32
  }
  func.func @transform_5(%arg0: i32, %arg1: i32) -> (i32, i32) {
    %c0_i32 = arith.constant 0 : i32
    %c0_i32_0 = arith.constant 0 : i32
    %c0_i32_1 = arith.constant 0 : i32
    return %c0_i32, %c0_i32_0 : i32, i32
  }
  func.func @transform_6(%arg0: i32, %arg1: i32) -> (i32, i32) {
    %c2_i32 = arith.constant 2 : i32
    %0 = arith.cmpi eq, %arg0, %c2_i32 : i32
    %c0_i32 = arith.constant 0 : i32
    %1 = arith.select %0, %arg1, %c0_i32 : i32
    %c0_i32_0 = arith.constant 0 : i32
    %c0_i32_1 = arith.constant 0 : i32
    return %1, %c0_i32_0 : i32, i32
  }
}

</mosaic_0001>

<llo_original>
// kernel: tpu_custom_call.1
$region0: #{tpu_custom_call.1}
  #allocation0 [shape = 'u32[]', space=smem, size = 0x4, offset = 0x4, fixed_abs, tag = 'smem constant byte address 0x4 - core index']
  #allocation1 [shape = 'u32[144,128]{1,0:T(1,128)}', space=vmem, size = 0x12000, scoped, tag = 'internal scratch']
  #allocation2 [shape = 'f32[128,128]{1,0:T(8,128)}', space=vmem, size = 0x10000, scoped, tag = 'scratch operand']
  #allocation3 [shape = 'f32[128,128]{1,0:T(8,128)}', space=vmem, size = 0x10000, scoped, tag = 'scratch operand']
  %s0 = inlined_call_operand.hbm [shape: f32[128,128], index: 0, kind: input, shape index: {}]
  %s1 = inlined_call_operand.hbm [shape: f32[128,128], index: 1, kind: input, shape index: {}]
  %s2 = inlined_call_operand.hbm [shape: f32[128,128], index: 2, kind: input, shape index: {}]
  %s3 = inlined_call_operand.vmem [shape: f32[1,128], index: 3, kind: input, shape index: {}]
  %s4 = inlined_call_operand.hbm [shape: f32[128,128], index: 4, kind: input, shape index: {}]
  %s5 = inlined_call_operand.vmem [shape: f32[1,128], index: 5, kind: input, shape index: {}]
  %s6 = inlined_call_operand.hbm [shape: f32[128,128], index: 6, kind: output, shape index: {}]
  %s7 = sld [smem:[#allocation0]]
  $region85: #{tpu_custom_call.1} parent=0
    _
  %s9 = ssub.s32 1, %s7
  %s10 = scalar_select 0, %s9, %s7
  $region1: #{tpu_custom_call.1} parent=0
    #allocation4 [shape = 'u8[131072]{0}', space=vmem, size = 0x20000, scoped, tag = 'input window, operand 0']
    #allocation5 [shape = 's32[2]{0}', space=sflag, size = 0x8, scoped, tag = 'scoped memory for tpu_custom_call.1']
    #allocation6 [shape = 's32[2]{0}', space=sflag, size = 0x8, scoped, tag = 'scoped memory for tpu_custom_call.1']
    #allocation7 [shape = 'u8[131072]{0}', space=vmem, size = 0x20000, scoped, tag = 'input window, operand 1']
    #allocation8 [shape = 's32[2]{0}', space=sflag, size = 0x8, scoped, tag = 'scoped memory for tpu_custom_call.1']
    #allocation9 [shape = 'u8[65536]{0}', space=vmem, size = 0x10000, scoped, tag = 'input window, operand 2, single buffered']
    #allocation10 [shape = 'u8[65536]{0}', space=vmem, size = 0x10000, scoped, tag = 'input window, operand 4, single buffered']
    #allocation11 [shape = 's32[1]{0}', space=sflag, size = 0x4, scoped, tag = 'scoped memory for tpu_custom_call.1']
    #allocation12 [shape = 'u8[131072]{0}', space=vmem, size = 0x20000, scoped, tag = 'output window, operand 0']
    %11 = vsyncpa [#allocation5], 0
    %s12 = scalar_lea.sflag [#allocation5], 1
    %13 = vsyncpa %s12, 0
    %14 = vsyncpa [#allocation8], 0
    %s15 = scalar_lea.sflag [#allocation8], 1
    %16 = vsyncpa %s15, 0
    %17 = vsyncpa [#allocation11], 0
    %18 = vsyncpa [#allocation6], 0
    %s19 = scalar_lea.sflag [#allocation6], 1
    %20 = vsyncpa %s19, 0
    loop: start=0, step=1, limit=5
    $region2: #{tpu_custom_call.1} parent=1 // loop_pre_header
      _
    $region3: #{tpu_custom_call.1} parent=1 // loop_header
      %s22 = sphi 0, %s26
      %p23 = scmp.ge.s32.totalorder %s22, 5
      %s29 = sphi 0, %s41
      %s30 = sphi 0, %s37
      %s31 = sphi 0, %s29
      %s32 = sphi 0, %s30
      %s33 = sphi 0, %s31
      %s34 = sphi 0, %s32
      %s48 = sphi 0, %s50
      %s51 = sphi 0, %s48
      %s52 = sphi 0, %s51
      %s68 = sphi 0, %s52
      %s78 = sphi 0, %s80
      %s81 = sphi 0, %s78
      %s82 = sphi 0, %s81
      %s98 = sphi 0, %s82
      %s102 = sphi 0, %s102
      %s104 = sphi 0, %s102
      %s105 = sphi 0, %s104
      %s119 = sphi 0, %s105
      %s123 = sphi 0, %s123
      %s125 = sphi 0, %s123
      %s126 = sphi 0, %s125
      %s140 = sphi 0, %s126
      %s144 = sphi 0, %s144
      %s146 = sphi 0, %s144
      %s147 = sphi 0, %s146
      %s161 = sphi 0, %s147
      %s165 = sphi 0, %s165
      %s167 = sphi 0, %s165
      %s168 = sphi 0, %s167
      %s182 = sphi 0, %s168
      %s192 = sphi 0, %s194
      %s195 = sphi 0, %s192
      %s196 = sphi 0, %s195
      %s212 = sphi 0, %s196
    $region4: #{tpu_custom_call.1} parent=1 // loop_header_branch
      %25 = sbr.rel (%p23) target = $region8
    $region5: #{tpu_custom_call.1} parent=1 // loop_body
      %s27 = ssub.s32 %s22, 1
      %s28 = ssub.s32 %s22, 2
      %s35 = sadd.s32 1, %s30
      %p36 = scmp.ge.s32.totalorder %s35, 1
      %s37 = scalar_select %p36, 0, %s35
      %s38 = sadd.s32 1, %s29
      %s39 = scalar_select %p36, %s38, %s29
      %p40 = scmp.ge.s32.totalorder %s39, 3
      %s41 = scalar_select %p40, 0, %s39
      %p42 = scmp.eq.s32.totalorder %s29, 0
      %s43 = scalar_select %p42, %s30, 0
      %p44 = scmp.eq.s32.totalorder %s41, 0
      %s45 = scalar_select %p44, %s37, 0
      %s46 = ssub.s32 %s43, %s45
      %p47 = scmp.eq.s32.totalorder %s46, 0
      %s49 = sadd.s32 %s48, 1
      %s50 = scalar_select %p47, %s48, %s49
      %p53 = pneg %p47
      %p54 = scmp.eq.s32.totalorder %s22, 2
      %p55 = por %p53, %p54
      %p56 = scmp.ne.s32.totalorder %s48, %s51
      %p57 = scmp.eq.s32.totalorder %s22, 0
      %p58 = por %p56, %p57
      %p59 = scmp.ne.s32.totalorder %s48, %s51
      %p60 = scmp.eq.s32.totalorder %s27, 2
      %p61 = por %p59, %p60
      %p62 = scmp.ne.s32.totalorder %s51, %s52
      %p63 = scmp.eq.s32.totalorder %s27, 0
      %p64 = por %p62, %p63
      %p65 = scmp.ne.s32.totalorder %s51, %s52
      %p66 = scmp.eq.s32.totalorder %s28, 2
      %p67 = por %p65, %p66
      %p69 = scmp.ne.s32.totalorder %s52, %s68
      %p70 = scmp.eq.s32.totalorder %s28, 0
      %p71 = por %p69, %p70
      %p72 = scmp.eq.s32.totalorder %s29, 0
      %s73 = scalar_select %p72, 0, %s30
      %p74 = scmp.eq.s32.totalorder %s41, 0
      %s75 = scalar_select %p74, 0, %s37
      %s76 = ssub.s32 %s73, %s75
      %p77 = scmp.eq.s32.totalorder %s76, 0
      %s79 = sadd.s32 %s78, 1
      %s80 = scalar_select %p77, %s78, %s79
      %p83 = pneg %p77
      %p84 = scmp.eq.s32.totalorder %s22, 2
      %p85 = por %p83, %p84
      %p86 = scmp.ne.s32.totalorder %s78, %s81
      %p87 = scmp.eq.s32.totalorder %s22, 0
      %p88 = por %p86, %p87
      %p89 = scmp.ne.s32.totalorder %s78, %s81
      %p90 = scmp.eq.s32.totalorder %s27, 2
      %p91 = por %p89, %p90
      %p92 = scmp.ne.s32.totalorder %s81, %s82
      %p93 = scmp.eq.s32.totalorder %s27, 0
      %p94 = por %p92, %p93
      %p95 = scmp.ne.s32.totalorder %s81, %s82
      %p96 = scmp.eq.s32.totalorder %s28, 2
      %p97 = por %p95, %p96
      %p99 = scmp.ne.s32.totalorder %s82, %s98
      %p100 = scmp.eq.s32.totalorder %s28, 0
      %p101 = por %p99, %p100
      %s103 = sadd.s32 %s102, 1
      %p106 = scmp.eq.s32.totalorder %s22, 2
      %p107 = scmp.ne.s32.totalorder %s102, %s104
      %p108 = scmp.eq.s32.totalorder %s22, 0
      %p109 = por %p107, %p108
      %p110 = scmp.ne.s32.totalorder %s102, %s104
      %p111 = scmp.eq.s32.totalorder %s27, 2
      %p112 = por %p110, %p111
      %p113 = scmp.ne.s32.totalorder %s104, %s105
      %p114 = scmp.eq.s32.totalorder %s27, 0
      %p115 = por %p113, %p114
      %p116 = scmp.ne.s32.totalorder %s104, %s105
      %p117 = scmp.eq.s32.totalorder %s28, 2
      %p118 = por %p116, %p117
      %p120 = scmp.ne.s32.totalorder %s105, %s119
      %p121 = scmp.eq.s32.totalorder %s28, 0
      %p122 = por %p120, %p121
      %s124 = sadd.s32 %s123, 1
      %p127 = scmp.eq.s32.totalorder %s22, 2
      %p128 = scmp.ne.s32.totalorder %s123, %s125
      %p129 = scmp.eq.s32.totalorder %s22, 0
      %p130 = por %p128, %p129
      %p131 = scmp.ne.s32.totalorder %s123, %s125
      %p132 = scmp.eq.s32.totalorder %s27, 2
      %p133 = por %p131, %p132
      %p134 = scmp.ne.s32.totalorder %s125, %s126
      %p135 = scmp.eq.s32.totalorder %s27, 0
      %p136 = por %p134, %p135
      %p137 = scmp.ne.s32.totalorder %s125, %s126
      %p138 = scmp.eq.s32.totalorder %s28, 2
      %p139 = por %p137, %p138
      %p141 = scmp.ne.s32.totalorder %s126, %s140
      %p142 = scmp.eq.s32.totalorder %s28, 0
      %p143 = por %p141, %p142
      %s145 = sadd.s32 %s144, 1
      %p148 = scmp.eq.s32.totalorder %s22, 2
      %p149 = scmp.ne.s32.totalorder %s144, %s146
      %p150 = scmp.eq.s32.totalorder %s22, 0
      %p151 = por %p149, %p150
      %p152 = scmp.ne.s32.totalorder %s144, %s146
      %p153 = scmp.eq.s32.totalorder %s27, 2
      %p154 = por %p152, %p153
      %p155 = scmp.ne.s32.totalorder %s146, %s147
      %p156 = scmp.eq.s32.totalorder %s27, 0
      %p157 = por %p155, %p156
      %p158 = scmp.ne.s32.totalorder %s146, %s147
      %p159 = scmp.eq.s32.totalorder %s28, 2
      %p160 = por %p158, %p159
      %p162 = scmp.ne.s32.totalorder %s147, %s161
      %p163 = scmp.eq.s32.totalorder %s28, 0
      %p164 = por %p162, %p163
      %s166 = sadd.s32 %s165, 1
      %p169 = scmp.eq.s32.totalorder %s22, 2
      %p170 = scmp.ne.s32.totalorder %s165, %s167
      %p171 = scmp.eq.s32.totalorder %s22, 0
      %p172 = por %p170, %p171
      %p173 = scmp.ne.s32.totalorder %s165, %s167
      %p174 = scmp.eq.s32.totalorder %s27, 2
      %p175 = por %p173, %p174
      %p176 = scmp.ne.s32.totalorder %s167, %s168
      %p177 = scmp.eq.s32.totalorder %s27, 0
      %p178 = por %p176, %p177
      %p179 = scmp.ne.s32.totalorder %s167, %s168
      %p180 = scmp.eq.s32.totalorder %s28, 2
      %p181 = por %p179, %p180
      %p183 = scmp.ne.s32.totalorder %s168, %s182
      %p184 = scmp.eq.s32.totalorder %s28, 0
      %p185 = por %p183, %p184
      %p186 = scmp.eq.s32.totalorder %s29, 2
      %s187 = scalar_select %p186, %s30, 0
      %p188 = scmp.eq.s32.totalorder %s41, 2
      %s189 = scalar_select %p188, %s37, 0
      %s190 = ssub.s32 %s187, %s189
      %p191 = scmp.eq.s32.totalorder %s190, 0
      %s193 = sadd.s32 %s192, 1
      %s194 = scalar_select %p191, %s192, %s193
      %p197 = pneg %p191
      %p198 = scmp.eq.s32.totalorder %s22, 2
      %p199 = por %p197, %p198
      %p200 = scmp.ne.s32.totalorder %s192, %s195
      %p201 = scmp.eq.s32.totalorder %s22, 0
      %p202 = por %p200, %p201
      %p203 = scmp.ne.s32.totalorder %s192, %s195
      %p204 = scmp.eq.s32.totalorder %s27, 2
      %p205 = por %p203, %p204
      %p206 = scmp.ne.s32.totalorder %s195, %s196
      %p207 = scmp.eq.s32.totalorder %s27, 0
      %p208 = por %p206, %p207
      %p209 = scmp.ne.s32.totalorder %s195, %s196
      %p210 = scmp.eq.s32.totalorder %s28, 2
      %p211 = por %p209, %p210
      %p213 = scmp.ne.s32.totalorder %s196, %s212
      %p214 = scmp.eq.s32.totalorder %s28, 0
      %p215 = por %p213, %p214
      %p216 = scmp.le.s32.totalorder 1, %s22
      %p217 = scmp.lt.s32.totalorder %s22, 4
      %p218 = pnand %p216, %p217
      %p219 = pneg %p218
      // Predicated region
      $region9: #{tpu_custom_call.1} parent=5 // pred_check
        _
      $region10: #{tpu_custom_call.1} parent=5 // pred_check_branch
        %221 = sbr.rel (%p218) target = $region12
      $region11: #{tpu_custom_call.1} parent=5 // pred_region
        %s222 = ssub.s32 %s22, 1
        // Predicated region
        $region13: #{tpu_custom_call.1} parent=11 // pred_check
          %p223 = pneg %p115
        $region14: #{tpu_custom_call.1} parent=11 // pred_check_branch
          %225 = sbr.rel (%p223) target = $region16
        $region15: #{tpu_custom_call.1} parent=11 // pred_region
          %s227 = ssub.s32 2048, 2048
          %228 = vsyncadd [#allocation8], %s227
          %s229 = sshll.u32 [#allocation9], 4
          %s230 = int_to_ptr.vmem [resolvable:$true] %s229
          %235 = dma.hbm_to_vmem [thread:$0]  %s2, 2048, %s230, [#allocation8], 128, 128, 8
        $region16: #{tpu_custom_call.1} parent=11 // pred_fallthru
          _
        // Predicated region
        $region17: #{tpu_custom_call.1} parent=11 // pred_check
          %p236 = pneg %p136
        $region18: #{tpu_custom_call.1} parent=11 // pred_check_branch
          %238 = sbr.rel (%p236) target = $region20
        $region19: #{tpu_custom_call.1} parent=11 // pred_region
          _
        $region20: #{tpu_custom_call.1} parent=11 // pred_fallthru
          _
        // Predicated region
        $region21: #{tpu_custom_call.1} parent=11 // pred_check
          %p239 = pneg %p157
        $region22: #{tpu_custom_call.1} parent=11 // pred_check_branch
          %241 = sbr.rel (%p239) target = $region24
        $region23: #{tpu_custom_call.1} parent=11 // pred_region
          %s243 = ssub.s32 2048, 2048
          %244 = vsyncadd [#allocation11], %s243
          %s245 = sshll.u32 [#allocation10], 4
          %s246 = int_to_ptr.vmem [resolvable:$true] %s245
          %251 = dma.hbm_to_vmem [thread:$0]  %s4, 2048, %s246, [#allocation11], 128, 128, 8
        $region24: #{tpu_custom_call.1} parent=11 // pred_fallthru
          _
        // Predicated region
        $region25: #{tpu_custom_call.1} parent=11 // pred_check
          %p252 = pneg %p178
        $region26: #{tpu_custom_call.1} parent=11 // pred_check_branch
          %254 = sbr.rel (%p252) target = $region28
        $region27: #{tpu_custom_call.1} parent=11 // pred_region
          _
        $region28: #{tpu_custom_call.1} parent=11 // pred_fallthru
          _
      $region12: #{tpu_custom_call.1} parent=5 // pred_fallthru
        _
      %p255 = scmp.lt.s32.totalorder %s22, 3
      // Predicated region
      $region29: #{tpu_custom_call.1} parent=5 // pred_check
        %p256 = pneg %p255
      $region30: #{tpu_custom_call.1} parent=5 // pred_check_branch
        %258 = sbr.rel (%p256) target = $region32
      $region31: #{tpu_custom_call.1} parent=5 // pred_region
        // Predicated region
        $region33: #{tpu_custom_call.1} parent=31 // pred_check
          %p259 = pneg %p58
        $region34: #{tpu_custom_call.1} parent=31 // pred_check_branch
          %261 = sbr.rel (%p259) target = $region36
        $region35: #{tpu_custom_call.1} parent=31 // pred_region
          %s262 = sand.u32 %s48, 1
          %s263 = scalar_lea.sflag [#allocation5], %s262
          %s264 = sand.u32 %s48, 1
          %s265 = smul.addr %s264, 128
          %s266 = scalar_lea.vmem [#allocation4], %s265
          %p267 = scmp.eq.s32.totalorder %s29, 0
          %s268 = scalar_select %p267, %s30, 0
          %s269 = smul.u32 16, %s268
          %s271 = ssub.s32 2048, 2048
          %272 = vsyncadd %s263, %s271
          %s273 = smul.addr %s269, 128
          %s274 = scalar_lea.hbm %s0, %s273
          %s275 = sshll.u32 %s266, 4
          %s276 = int_to_ptr.vmem [resolvable:$true] %s275
          %281 = dma.hbm_to_vmem [thread:$0]  %s274, 2048, %s276, %s263, 128, 128, 8
        $region36: #{tpu_custom_call.1} parent=31 // pred_fallthru
          _
        // Predicated region
        $region37: #{tpu_custom_call.1} parent=31 // pred_check
          %p282 = pneg %p88
        $region38: #{tpu_custom_call.1} parent=31 // pred_check_branch
          %284 = sbr.rel (%p282) target = $region40
        $region39: #{tpu_custom_call.1} parent=31 // pred_region
          %s285 = sand.u32 %s22, 1
          %s286 = scalar_lea.sflag [#allocation8], %s285
          %s287 = sand.u32 %s78, 1
          %s288 = smul.addr %s287, 128
          %s289 = scalar_lea.vmem [#allocation7], %s288
          %p290 = scmp.eq.s32.totalorder %s29, 0
          %s291 = scalar_select %p290, 0, %s30
          %s292 = smul.u32 16, %s291
          %s294 = ssub.s32 2048, 2048
          %295 = vsyncadd %s286, %s294
          %s296 = smul.addr %s292, 128
          %s297 = scalar_lea.hbm %s1, %s296
          %s298 = sshll.u32 %s289, 4
          %s299 = int_to_ptr.vmem [resolvable:$true] %s298
          %304 = dma.hbm_to_vmem [thread:$0]  %s297, 2048, %s299, %s286, 128, 128, 8
        $region40: #{tpu_custom_call.1} parent=31 // pred_fallthru
          _
      $region32: #{tpu_custom_call.1} parent=5 // pred_fallthru
        _
      %p305 = scmp.le.s32.totalorder 1, %s22
      %p306 = scmp.lt.s32.totalorder %s22, 4
      %p307 = pnand %p305, %p306
      %p308 = pneg %p307
      // Predicated region
      $region41: #{tpu_custom_call.1} parent=5 // pred_check
        _
      $region42: #{tpu_custom_call.1} parent=5 // pred_check_branch
        %310 = sbr.rel (%p307) target = $region44
      $region43: #{tpu_custom_call.1} parent=5 // pred_region
        %s311 = ssub.s32 %s22, 1
        %s312 = sand.u32 %s51, 1
        %s313 = scalar_lea.sflag [#allocation5], %s312
        %s314 = sand.u32 %s51, 1
        %s315 = smul.addr %s314, 128
        %s316 = scalar_lea.vmem [#allocation4], %s315
        // Predicated region
        $region45: #{tpu_custom_call.1} parent=43 // pred_check
          %p317 = pneg %p64
        $region46: #{tpu_custom_call.1} parent=43 // pred_check_branch
          %319 = sbr.rel (%p317) target = $region48
        $region47: #{tpu_custom_call.1} parent=43 // pred_region
          %320 = dma.done %s313, 2048
        $region48: #{tpu_custom_call.1} parent=43 // pred_fallthru
          _
        %s321 = sand.u32 %s27, 1
        %s322 = scalar_lea.sflag [#allocation8], %s321
        %s323 = sand.u32 %s81, 1
        %s324 = smul.addr %s323, 128
        %s325 = scalar_lea.vmem [#allocation7], %s324
        // Predicated region
        $region49: #{tpu_custom_call.1} parent=43 // pred_check
          %p326 = pneg %p94
        $region50: #{tpu_custom_call.1} parent=43 // pred_check_branch
          %328 = sbr.rel (%p326) target = $region52
        $region51: #{tpu_custom_call.1} parent=43 // pred_region
          %329 = dma.done %s322, 2048
        $region52: #{tpu_custom_call.1} parent=43 // pred_fallthru
          _
        // Predicated region
        $region53: #{tpu_custom_call.1} parent=43 // pred_check
          %p330 = pneg %p115
        $region54: #{tpu_custom_call.1} parent=43 // pred_check_branch
          %332 = sbr.rel (%p330) target = $region56
        $region55: #{tpu_custom_call.1} parent=43 // pred_region
          %333 = dma.done [#allocation8], 2048
        $region56: #{tpu_custom_call.1} parent=43 // pred_fallthru
          _
        // Predicated region
        $region57: #{tpu_custom_call.1} parent=43 // pred_check
          %p334 = pneg %p157
        $region58: #{tpu_custom_call.1} parent=43 // pred_check_branch
          %336 = sbr.rel (%p334) target = $region60
        $region59: #{tpu_custom_call.1} parent=43 // pred_region
          %337 = dma.done [#allocation11], 2048
        $region60: #{tpu_custom_call.1} parent=43 // pred_fallthru
          _
        %s338 = sand.u32 %s51, 1
        %s339 = scalar_lea.sflag [#allocation5], %s338
        %s340 = sand.u32 %s51, 1
        %s341 = smul.addr %s340, 128
        %s342 = scalar_lea.vmem [#allocation4], %s341
        %p343 = pneg %p64
        %p344 = pneg %p61
        %s345 = sand.u32 %s27, 1
        %s346 = scalar_lea.sflag [#allocation8], %s345
        %s347 = sand.u32 %s81, 1
        %s348 = smul.addr %s347, 128
        %s349 = scalar_lea.vmem [#allocation7], %s348
        %p350 = pneg %p94
        %p351 = pneg %p91
        %p352 = pneg %p115
        %p353 = pneg %p112
        %p354 = pneg %p136
        %p355 = pneg %p133
        %p356 = pneg %p157
        %p357 = pneg %p154
        %p358 = pneg %p178
        %p359 = pneg %p175
        %p360 = pneg %p208
        %p361 = pneg %p205
        %s362 = sand.u32 %s195, 1
        %s363 = scalar_lea.sflag [#allocation6], %s362
        %s364 = sand.u32 %s195, 1
        %s365 = smul.addr %s364, 128
        %s366 = scalar_lea.vmem [#allocation12], %s365
        %p367 = scmp.eq.s32.totalorder %s31, 0
        %s368 = scalar_select %p367, %s32, 0
        %s369 = smul.u32 16, %s368
        %p370 = scmp.eq.s32.totalorder %s31, 0
        %s371 = scalar_select %p370, 0, %s32
        %s372 = smul.u32 16, %s371
        %p373 = scmp.eq.s32.totalorder %s31, 2
        %s374 = scalar_select %p373, %s32, 0
        %s375 = smul.u32 16, %s374
        %s376 = smul.u32 %s32, 128
        %p377 = scmp.eq.s32.totalorder %s31, 0
        // Predicated region
        $region61: #{tpu_custom_call.1} parent=43 // pred_check
          %p378 = pneg %p377
        $region62: #{tpu_custom_call.1} parent=43 // pred_check_branch
          %380 = sbr.rel (%p378) target = $region64
        $region63: #{tpu_custom_call.1} parent=43 // pred_region
          %v381 = vld [vmem:[%s316] sm:$0xff]
          %v382 = vld [vmem:[%s316 + $0x8] sm:$0xff]
          %v383 = vld [vmem:[%s316 + $0x10] sm:$0xff]
          %v384 = vld [vmem:[%s316 + $0x18] sm:$0xff]
          %v385 = vld [vmem:[%s316 + $0x20] sm:$0xff]
          %v386 = vld [vmem:[%s316 + $0x28] sm:$0xff]
          %v387 = vld [vmem:[%s316 + $0x30] sm:$0xff]
          %v388 = vld [vmem:[%s316 + $0x38] sm:$0xff]
          %v389 = vld [vmem:[%s316 + $0x40] sm:$0xff]
          %v390 = vld [vmem:[%s316 + $0x48] sm:$0xff]
          %v391 = vld [vmem:[%s316 + $0x50] sm:$0xff]
          %v392 = vld [vmem:[%s316 + $0x58] sm:$0xff]
          %v393 = vld [vmem:[%s316 + $0x60] sm:$0xff]
          %v394 = vld [vmem:[%s316 + $0x68] sm:$0xff]
          %v395 = vld [vmem:[%s316 + $0x70] sm:$0xff]
          %v396 = vld [vmem:[%s316 + $0x78] sm:$0xff]
          %v397 = vld [vmem:[#allocation9] sm:$0xff]
          %v398 = vld [vmem:[#allocation9 + $0x8] sm:$0xff]
          %v399 = vld [vmem:[#allocation9 + $0x10] sm:$0xff]
          %v400 = vld [vmem:[#allocation9 + $0x18] sm:$0xff]
          %v401 = vld [vmem:[#allocation9 + $0x20] sm:$0xff]
          %v402 = vld [vmem:[#allocation9 + $0x28] sm:$0xff]
          %v403 = vld [vmem:[#allocation9 + $0x30] sm:$0xff]
          %v404 = vld [vmem:[#allocation9 + $0x38] sm:$0xff]
          %v405 = vld [vmem:[#allocation9 + $0x40] sm:$0xff]
          %v406 = vld [vmem:[#allocation9 + $0x48] sm:$0xff]
          %v407 = vld [vmem:[#allocation9 + $0x50] sm:$0xff]
          %v408 = vld [vmem:[#allocation9 + $0x58] sm:$0xff]
          %v409 = vld [vmem:[#allocation9 + $0x60] sm:$0xff]
          %v410 = vld [vmem:[#allocation9 + $0x68] sm:$0xff]
          %v411 = vld [vmem:[#allocation9 + $0x70] sm:$0xff]
          %v412 = vld [vmem:[#allocation9 + $0x78] sm:$0xff]
          %413 = vmatprep.subr.mxu0 0.0
          %414 = vmatpush1.msra.mxu0 %v412
          %415 = vmatprep.subr.mxu0 0.0
          %416 = vmatpush1.msra.mxu0 %v411
          %417 = vmatprep.subr.mxu0 0.0
          %418 = vmatpush1.msra.mxu0 %v410
          %419 = vmatprep.subr.mxu0 0.0
          %420 = vmatpush1.msra.mxu0 %v409
          %421 = vmatprep.subr.mxu0 0.0
          %422 = vmatpush1.msra.mxu0 %v408
          %423 = vmatprep.subr.mxu0 0.0
          %424 = vmatpush1.msra.mxu0 %v407
          %425 = vmatprep.subr.mxu0 0.0
          %426 = vmatpush1.msra.mxu0 %v406
          %427 = vmatprep.subr.mxu0 0.0
          %428 = vmatpush1.msra.mxu0 %v405
          %429 = vmatprep.subr.mxu0 0.0
          %430 = vmatpush1.msra.mxu0 %v404
          %431 = vmatprep.subr.mxu0 0.0
          %432 = vmatpush1.msra.mxu0 %v403
          %433 = vmatprep.subr.mxu0 0.0
          %434 = vmatpush1.msra.mxu0 %v402
          %435 = vmatprep.subr.mxu0 0.0
          %436 = vmatpush1.msra.mxu0 %v401
          %437 = vmatprep.subr.mxu0 0.0
          %438 = vmatpush1.msra.mxu0 %v400
          %439 = vmatprep.subr.mxu0 0.0
          %440 = vmatpush1.msra.mxu0 %v399
          %441 = vmatprep.subr.mxu0 0.0
          %442 = vmatpush1.msra.mxu0 %v398
          %443 = vmatprep.subr.mxu0 0.0
          %444 = vmatpush1.msra.mxu0 %v397
          %445 = vmatprep.subr.mxu0 0.0
          %446 = vmatpush2.msra.mxu0 0.0
          %447 = vmatprep.subr.mxu0 0.0
          %448 = vmatpush2.msra.mxu0 0.0
          %449 = vmatprep.subr.mxu0 0.0
          %450 = vmatpush2.msra.mxu0 0.0
          %451 = vmatprep.subr.mxu0 0.0
          %452 = vmatpush2.msra.mxu0 0.0
          %453 = vmatprep.subr.mxu0 0.0
          %454 = vmatpush2.msra.mxu0 0.0
          %455 = vmatprep.subr.mxu0 0.0
          %456 = vmatpush2.msra.mxu0 0.0
          %457 = vmatprep.subr.mxu0 0.0
          %458 = vmatpush2.msra.mxu0 0.0
          %459 = vmatprep.subr.mxu0 0.0
          %460 = vmatpush2.msra.mxu0 0.0
          %461 = vmatprep.subr.mxu0 0.0
          %462 = vmatpush2.msra.mxu0 0.0
          %463 = vmatprep.subr.mxu0 0.0
          %464 = vmatpush2.msra.mxu0 0.0
          %465 = vmatprep.subr.mxu0 0.0
          %466 = vmatpush2.msra.mxu0 0.0
          %467 = vmatprep.subr.mxu0 0.0
          %468 = vmatpush2.msra.mxu0 0.0
          %469 = vmatprep.subr.mxu0 0.0
          %470 = vmatpush2.msra.mxu0 0.0
          %471 = vmatprep.subr.mxu0 0.0
          %472 = vmatpush2.msra.mxu0 0.0
          %473 = vmatprep.subr.mxu0 0.0
          %474 = vmatpush2.msra.mxu0 0.0
          %475 = vmatprep.subr.mxu0 0.0
          %476 = vmatpush2.msra.mxu0 0.0
          %477 = vmatprep.mubr.f32.mxu0 0.0
          %478 = vmatmul.mubr.f32.gmra.mxu0 %v381
          %v479 = vpop.f32.mrf.mxu0
          %v480 = vadd.f32 0.0, %v479
          %v481 = vpop.f32.mrf.mxu0
          %482 = vmatprep.mubr.f32.mxu0 0.0
          %483 = vmatmul.mubr.f32.gmra.mxu0 %v382
          %v484 = vpop.f32.mrf.mxu0
          %v485 = vadd.f32 0.0, %v484
          %v486 = vpop.f32.mrf.mxu0
          %487 = vmatprep.mubr.f32.mxu0 0.0
          %488 = vmatmul.mubr.f32.gmra.mxu0 %v383
          %v489 = vpop.f32.mrf.mxu0
          %v490 = vadd.f32 0.0, %v489
          %v491 = vpop.f32.mrf.mxu0
          %492 = vmatprep.mubr.f32.mxu0 0.0
          %493 = vmatmul.mubr.f32.gmra.mxu0 %v384
          %v494 = vpop.f32.mrf.mxu0
          %v495 = vadd.f32 0.0, %v494
          %v496 = vpop.f32.mrf.mxu0
          %497 = vmatprep.mubr.f32.mxu0 0.0
          %498 = vmatmul.mubr.f32.gmra.mxu0 %v385
          %v499 = vpop.f32.mrf.mxu0
          %v500 = vadd.f32 0.0, %v499
          %v501 = vpop.f32.mrf.mxu0
          %502 = vmatprep.mubr.f32.mxu0 0.0
          %503 = vmatmul.mubr.f32.gmra.mxu0 %v386
          %v504 = vpop.f32.mrf.mxu0
          %v505 = vadd.f32 0.0, %v504
          %v506 = vpop.f32.mrf.mxu0
          %507 = vmatprep.mubr.f32.mxu0 0.0
          %508 = vmatmul.mubr.f32.gmra.mxu0 %v387
          %v509 = vpop.f32.mrf.mxu0
          %v510 = vadd.f32 0.0, %v509
          %v511 = vpop.f32.mrf.mxu0
          %512 = vmatprep.mubr.f32.mxu0 0.0
          %513 = vmatmul.mubr.f32.gmra.mxu0 %v388
          %v514 = vpop.f32.mrf.mxu0
          %v515 = vadd.f32 0.0, %v514
          %v516 = vpop.f32.mrf.mxu0
          %517 = vmatprep.mubr.f32.mxu0 0.0
          %518 = vmatmul.mubr.f32.gmra.mxu0 %v389
          %v519 = vpop.f32.mrf.mxu0
          %v520 = vadd.f32 0.0, %v519
          %v521 = vpop.f32.mrf.mxu0
          %522 = vmatprep.mubr.f32.mxu0 0.0
          %523 = vmatmul.mubr.f32.gmra.mxu0 %v390
          %v524 = vpop.f32.mrf.mxu0
          %v525 = vadd.f32 0.0, %v524
          %v526 = vpop.f32.mrf.mxu0
          %527 = vmatprep.mubr.f32.mxu0 0.0
          %528 = vmatmul.mubr.f32.gmra.mxu0 %v391
          %v529 = vpop.f32.mrf.mxu0
          %v530 = vadd.f32 0.0, %v529
          %v531 = vpop.f32.mrf.mxu0
          %532 = vmatprep.mubr.f32.mxu0 0.0
          %533 = vmatmul.mubr.f32.gmra.mxu0 %v392
          %v534 = vpop.f32.mrf.mxu0
          %v535 = vadd.f32 0.0, %v534
          %v536 = vpop.f32.mrf.mxu0
          %537 = vmatprep.mubr.f32.mxu0 0.0
          %538 = vmatmul.mubr.f32.gmra.mxu0 %v393
          %v539 = vpop.f32.mrf.mxu0
          %v540 = vadd.f32 0.0, %v539
          %v541 = vpop.f32.mrf.mxu0
          %542 = vmatprep.mubr.f32.mxu0 0.0
          %543 = vmatmul.mubr.f32.gmra.mxu0 %v394
          %v544 = vpop.f32.mrf.mxu0
          %v545 = vadd.f32 0.0, %v544
          %v546 = vpop.f32.mrf.mxu0
          %547 = vmatprep.mubr.f32.mxu0 0.0
          %548 = vmatmul.mubr.f32.gmra.mxu0 %v395
          %v549 = vpop.f32.mrf.mxu0
          %v550 = vadd.f32 0.0, %v549
          %v551 = vpop.f32.mrf.mxu0
          %552 = vmatprep.mubr.f32.mxu0 0.0
          %553 = vmatmul.mubr.f32.gmra.mxu0 %v396
          %v554 = vpop.f32.mrf.mxu0
          %v555 = vadd.f32 0.0, %v554
          %v556 = vpop.f32.mrf.mxu0
          %557 = vdwg.mxu0
          %s558 = scalar_lea.vmem [#allocation2], %s376
          %559 = vst [vmem:[%s558] sm:$0xff] %v480
          %560 = vst [vmem:[%s558 + $0x8] sm:$0xff] %v485
          %561 = vst [vmem:[%s558 + $0x10] sm:$0xff] %v490
          %562 = vst [vmem:[%s558 + $0x18] sm:$0xff] %v495
          %563 = vst [vmem:[%s558 + $0x20] sm:$0xff] %v500
          %564 = vst [vmem:[%s558 + $0x28] sm:$0xff] %v505
          %565 = vst [vmem:[%s558 + $0x30] sm:$0xff] %v510
          %566 = vst [vmem:[%s558 + $0x38] sm:$0xff] %v515
          %567 = vst [vmem:[%s558 + $0x40] sm:$0xff] %v520
          %568 = vst [vmem:[%s558 + $0x48] sm:$0xff] %v525
          %569 = vst [vmem:[%s558 + $0x50] sm:$0xff] %v530
          %570 = vst [vmem:[%s558 + $0x58] sm:$0xff] %v535
          %571 = vst [vmem:[%s558 + $0x60] sm:$0xff] %v540
          %572 = vst [vmem:[%s558 + $0x68] sm:$0xff] %v545
          %573 = vst [vmem:[%s558 + $0x70] sm:$0xff] %v550
          %574 = vst [vmem:[%s558 + $0x78] sm:$0xff] %v555
        $region64: #{tpu_custom_call.1} parent=43 // pred_fallthru
          _
        %p575 = scmp.eq.s32.totalorder %s31, 1
        // Predicated region
        $region65: #{tpu_custom_call.1} parent=43 // pred_check
          %p576 = pneg %p575
        $region66: #{tpu_custom_call.1} parent=43 // pred_check_branch
          %578 = sbr.rel (%p576) target = $region68
        $region67: #{tpu_custom_call.1} parent=43 // pred_region
          %v579 = vld [vmem:[%s325] sm:$0xff]
          %v580 = vld [vmem:[%s325 + $0x8] sm:$0xff]
          %v581 = vld [vmem:[%s325 + $0x10] sm:$0xff]
          %v582 = vld [vmem:[%s325 + $0x18] sm:$0xff]
          %v583 = vld [vmem:[%s325 + $0x20] sm:$0xff]
          %v584 = vld [vmem:[%s325 + $0x28] sm:$0xff]
          %v585 = vld [vmem:[%s325 + $0x30] sm:$0xff]
          %v586 = vld [vmem:[%s325 + $0x38] sm:$0xff]
          %v587 = vld [vmem:[%s325 + $0x40] sm:$0xff]
          %v588 = vld [vmem:[%s325 + $0x48] sm:$0xff]
          %v589 = vld [vmem:[%s325 + $0x50] sm:$0xff]
          %v590 = vld [vmem:[%s325 + $0x58] sm:$0xff]
          %v591 = vld [vmem:[%s325 + $0x60] sm:$0xff]
          %v592 = vld [vmem:[%s325 + $0x68] sm:$0xff]
          %v593 = vld [vmem:[%s325 + $0x70] sm:$0xff]
          %v594 = vld [vmem:[%s325 + $0x78] sm:$0xff]
          %v595 = vld [vmem:[#allocation2] sm:$0xff]
          %v596 = vld [vmem:[#allocation2 + $0x8] sm:$0xff]
          %v597 = vld [vmem:[#allocation2 + $0x10] sm:$0xff]
          %v598 = vld [vmem:[#allocation2 + $0x18] sm:$0xff]
          %v599 = vld [vmem:[#allocation2 + $0x20] sm:$0xff]
          %v600 = vld [vmem:[#allocation2 + $0x28] sm:$0xff]
          %v601 = vld [vmem:[#allocation2 + $0x30] sm:$0xff]
          %v602 = vld [vmem:[#allocation2 + $0x38] sm:$0xff]
          %v603 = vld [vmem:[#allocation2 + $0x40] sm:$0xff]
          %v604 = vld [vmem:[#allocation2 + $0x48] sm:$0xff]
          %v605 = vld [vmem:[#allocation2 + $0x50] sm:$0xff]
          %v606 = vld [vmem:[#allocation2 + $0x58] sm:$0xff]
          %v607 = vld [vmem:[#allocation2 + $0x60] sm:$0xff]
          %v608 = vld [vmem:[#allocation2 + $0x68] sm:$0xff]
          %v609 = vld [vmem:[#allocation2 + $0x70] sm:$0xff]
          %v610 = vld [vmem:[#allocation2 + $0x78] sm:$0xff]
          %v611 = vld [vmem:[%s3] sm:$0x1]
          %v613 = vlaneseq
          %v614 = vshrl.u32 %v613, 7
          %v615 = vsub.s32 0, %v614
          %v616 = vrot.slane %v611, %v615
          %618 = vmatprep.subr.mxu0 0.0
          %619 = vmatpush1.msra.mxu0 %v610
          %620 = vmatprep.subr.mxu0 0.0
          %621 = vmatpush1.msra.mxu0 %v609
          %622 = vmatprep.subr.mxu0 0.0
          %623 = vmatpush1.msra.mxu0 %v608
          %624 = vmatprep.subr.mxu0 0.0
          %625 = vmatpush1.msra.mxu0 %v607
          %626 = vmatprep.subr.mxu0 0.0
          %627 = vmatpush1.msra.mxu0 %v606
          %628 = vmatprep.subr.mxu0 0.0
          %629 = vmatpush1.msra.mxu0 %v605
          %630 = vmatprep.subr.mxu0 0.0
          %631 = vmatpush1.msra.mxu0 %v604
          %632 = vmatprep.subr.mxu0 0.0
          %633 = vmatpush1.msra.mxu0 %v603
          %634 = vmatprep.subr.mxu0 0.0
          %635 = vmatpush1.msra.mxu0 %v602
          %636 = vmatprep.subr.mxu0 0.0
          %637 = vmatpush1.msra.mxu0 %v601
          %638 = vmatprep.subr.mxu0 0.0
          %639 = vmatpush1.msra.mxu0 %v600
          %640 = vmatprep.subr.mxu0 0.0
          %641 = vmatpush1.msra.mxu0 %v599
          %642 = vmatprep.subr.mxu0 0.0
          %643 = vmatpush1.msra.mxu0 %v598
          %644 = vmatprep.subr.mxu0 0.0
          %645 = vmatpush1.msra.mxu0 %v597
          %646 = vmatprep.subr.mxu0 0.0
          %647 = vmatpush1.msra.mxu0 %v596
          %648 = vmatprep.subr.mxu0 0.0
          %649 = vmatpush1.msra.mxu0 %v595
          %650 = vmatprep.subr.mxu0 0.0
          %651 = vmatpush2.msra.mxu0 0.0
          %652 = vmatprep.subr.mxu0 0.0
          %653 = vmatpush2.msra.mxu0 0.0
          %654 = vmatprep.subr.mxu0 0.0
          %655 = vmatpush2.msra.mxu0 0.0
          %656 = vmatprep.subr.mxu0 0.0
          %657 = vmatpush2.msra.mxu0 0.0
          %658 = vmatprep.subr.mxu0 0.0
          %659 = vmatpush2.msra.mxu0 0.0
          %660 = vmatprep.subr.mxu0 0.0
          %661 = vmatpush2.msra.mxu0 0.0
          %662 = vmatprep.subr.mxu0 0.0
          %663 = vmatpush2.msra.mxu0 0.0
          %664 = vmatprep.subr.mxu0 0.0
          %665 = vmatpush2.msra.mxu0 0.0
          %666 = vmatprep.subr.mxu0 0.0
          %667 = vmatpush2.msra.mxu0 0.0
          %668 = vmatprep.subr.mxu0 0.0
          %669 = vmatpush2.msra.mxu0 0.0
          %670 = vmatprep.subr.mxu0 0.0
          %671 = vmatpush2.msra.mxu0 0.0
          %672 = vmatprep.subr.mxu0 0.0
          %673 = vmatpush2.msra.mxu0 0.0
          %674 = vmatprep.subr.mxu0 0.0
          %675 = vmatpush2.msra.mxu0 0.0
          %676 = vmatprep.subr.mxu0 0.0
          %677 = vmatpush2.msra.mxu0 0.0
          %678 = vmatprep.subr.mxu0 0.0
          %679 = vmatpush2.msra.mxu0 0.0
          %680 = vmatprep.subr.mxu0 0.0
          %681 = vmatpush2.msra.mxu0 0.0
          %682 = vmatprep.mubr.f32.mxu0 0.0
          %683 = vmatmul.mubr.f32.gmra.mxu0 %v579
          %v684 = vpop.f32.mrf.mxu0
          %v685 = vadd.f32 %v616, %v684
          %v686 = vpop.f32.mrf.mxu0
          %687 = vmatprep.mubr.f32.mxu0 0.0
          %688 = vmatmul.mubr.f32.gmra.mxu0 %v580
          %v689 = vpop.f32.mrf.mxu0
          %v690 = vadd.f32 %v616, %v689
          %v691 = vpop.f32.mrf.mxu0
          %692 = vmatprep.mubr.f32.mxu0 0.0
          %693 = vmatmul.mubr.f32.gmra.mxu0 %v581
          %v694 = vpop.f32.mrf.mxu0
          %v695 = vadd.f32 %v616, %v694
          %v696 = vpop.f32.mrf.mxu0
          %697 = vmatprep.mubr.f32.mxu0 0.0
          %698 = vmatmul.mubr.f32.gmra.mxu0 %v582
          %v699 = vpop.f32.mrf.mxu0
          %v700 = vadd.f32 %v616, %v699
          %v701 = vpop.f32.mrf.mxu0
          %702 = vmatprep.mubr.f32.mxu0 0.0
          %703 = vmatmul.mubr.f32.gmra.mxu0 %v583
          %v704 = vpop.f32.mrf.mxu0
          %v705 = vadd.f32 %v616, %v704
          %v706 = vpop.f32.mrf.mxu0
          %707 = vmatprep.mubr.f32.mxu0 0.0
          %708 = vmatmul.mubr.f32.gmra.mxu0 %v584
          %v709 = vpop.f32.mrf.mxu0
          %v710 = vadd.f32 %v616, %v709
          %v711 = vpop.f32.mrf.mxu0
          %712 = vmatprep.mubr.f32.mxu0 0.0
          %713 = vmatmul.mubr.f32.gmra.mxu0 %v585
          %v714 = vpop.f32.mrf.mxu0
          %v715 = vadd.f32 %v616, %v714
          %v716 = vpop.f32.mrf.mxu0
          %717 = vmatprep.mubr.f32.mxu0 0.0
          %718 = vmatmul.mubr.f32.gmra.mxu0 %v586
          %v719 = vpop.f32.mrf.mxu0
          %v720 = vadd.f32 %v616, %v719
          %v721 = vpop.f32.mrf.mxu0
          %722 = vmatprep.mubr.f32.mxu0 0.0
          %723 = vmatmul.mubr.f32.gmra.mxu0 %v587
          %v724 = vpop.f32.mrf.mxu0
          %v725 = vadd.f32 %v616, %v724
          %v726 = vpop.f32.mrf.mxu0
          %727 = vmatprep.mubr.f32.mxu0 0.0
          %728 = vmatmul.mubr.f32.gmra.mxu0 %v588
          %v729 = vpop.f32.mrf.mxu0
          %v730 = vadd.f32 %v616, %v729
          %v731 = vpop.f32.mrf.mxu0
          %732 = vmatprep.mubr.f32.mxu0 0.0
          %733 = vmatmul.mubr.f32.gmra.mxu0 %v589
          %v734 = vpop.f32.mrf.mxu0
          %v735 = vadd.f32 %v616, %v734
          %v736 = vpop.f32.mrf.mxu0
          %737 = vmatprep.mubr.f32.mxu0 0.0
          %738 = vmatmul.mubr.f32.gmra.mxu0 %v590
          %v739 = vpop.f32.mrf.mxu0
          %v740 = vadd.f32 %v616, %v739
          %v741 = vpop.f32.mrf.mxu0
          %742 = vmatprep.mubr.f32.mxu0 0.0
          %743 = vmatmul.mubr.f32.gmra.mxu0 %v591
          %v744 = vpop.f32.mrf.mxu0
          %v745 = vadd.f32 %v616, %v744
          %v746 = vpop.f32.mrf.mxu0
          %747 = vmatprep.mubr.f32.mxu0 0.0
          %748 = vmatmul.mubr.f32.gmra.mxu0 %v592
          %v749 = vpop.f32.mrf.mxu0
          %v750 = vadd.f32 %v616, %v749
          %v751 = vpop.f32.mrf.mxu0
          %752 = vmatprep.mubr.f32.mxu0 0.0
          %753 = vmatmul.mubr.f32.gmra.mxu0 %v593
          %v754 = vpop.f32.mrf.mxu0
          %v755 = vadd.f32 %v616, %v754
          %v756 = vpop.f32.mrf.mxu0
          %757 = vmatprep.mubr.f32.mxu0 0.0
          %758 = vmatmul.mubr.f32.gmra.mxu0 %v594
          %v759 = vpop.f32.mrf.mxu0
          %v760 = vadd.f32 %v616, %v759
          %v761 = vpop.f32.mrf.mxu0
          %762 = vdwg.mxu0
          %v763 = vmax.f32 %v685, 0.0
          %v764 = vmax.f32 %v690, 0.0
          %v765 = vmax.f32 %v695, 0.0
          %v766 = vmax.f32 %v700, 0.0
          %v767 = vmax.f32 %v705, 0.0
          %v768 = vmax.f32 %v710, 0.0
          %v769 = vmax.f32 %v715, 0.0
          %v770 = vmax.f32 %v720, 0.0
          %v771 = vmax.f32 %v725, 0.0
          %v772 = vmax.f32 %v730, 0.0
          %v773 = vmax.f32 %v735, 0.0
          %v774 = vmax.f32 %v740, 0.0
          %v775 = vmax.f32 %v745, 0.0
          %v776 = vmax.f32 %v750, 0.0
          %v777 = vmax.f32 %v755, 0.0
          %v778 = vmax.f32 %v760, 0.0
          %v779 = vld [vmem:[#allocation10] sm:$0xff]
          %v780 = vld [vmem:[#allocation10 + $0x8] sm:$0xff]
          %v781 = vld [vmem:[#allocation10 + $0x10] sm:$0xff]
          %v782 = vld [vmem:[#allocation10 + $0x18] sm:$0xff]
          %v783 = vld [vmem:[#allocation10 + $0x20] sm:$0xff]
          %v784 = vld [vmem:[#allocation10 + $0x28] sm:$0xff]
          %v785 = vld [vmem:[#allocation10 + $0x30] sm:$0xff]
          %v786 = vld [vmem:[#allocation10 + $0x38] sm:$0xff]
          %v787 = vld [vmem:[#allocation10 + $0x40] sm:$0xff]
          %v788 = vld [vmem:[#allocation10 + $0x48] sm:$0xff]
          %v789 = vld [vmem:[#allocation10 + $0x50] sm:$0xff]
          %v790 = vld [vmem:[#allocation10 + $0x58] sm:$0xff]
          %v791 = vld [vmem:[#allocation10 + $0x60] sm:$0xff]
          %v792 = vld [vmem:[#allocation10 + $0x68] sm:$0xff]
          %v793 = vld [vmem:[#allocation10 + $0x70] sm:$0xff]
          %v794 = vld [vmem:[#allocation10 + $0x78] sm:$0xff]
          %795 = vmatprep.subr.mxu0 0.0
          %796 = vmatpush1.msra.mxu0 %v794
          %797 = vmatprep.subr.mxu0 0.0
          %798 = vmatpush1.msra.mxu0 %v793
          %799 = vmatprep.subr.mxu0 0.0
          %800 = vmatpush1.msra.mxu0 %v792
          %801 = vmatprep.subr.mxu0 0.0
          %802 = vmatpush1.msra.mxu0 %v791
          %803 = vmatprep.subr.mxu0 0.0
          %804 = vmatpush1.msra.mxu0 %v790
          %805 = vmatprep.subr.mxu0 0.0
          %806 = vmatpush1.msra.mxu0 %v789
          %807 = vmatprep.subr.mxu0 0.0
          %808 = vmatpush1.msra.mxu0 %v788
          %809 = vmatprep.subr.mxu0 0.0
          %810 = vmatpush1.msra.mxu0 %v787
          %811 = vmatprep.subr.mxu0 0.0
          %812 = vmatpush1.msra.mxu0 %v786
          %813 = vmatprep.subr.mxu0 0.0
          %814 = vmatpush1.msra.mxu0 %v785
          %815 = vmatprep.subr.mxu0 0.0
          %816 = vmatpush1.msra.mxu0 %v784
          %817 = vmatprep.subr.mxu0 0.0
          %818 = vmatpush1.msra.mxu0 %v783
          %819 = vmatprep.subr.mxu0 0.0
          %820 = vmatpush1.msra.mxu0 %v782
          %821 = vmatprep.subr.mxu0 0.0
          %822 = vmatpush1.msra.mxu0 %v781
          %823 = vmatprep.subr.mxu0 0.0
          %824 = vmatpush1.msra.mxu0 %v780
          %825 = vmatprep.subr.mxu0 0.0
          %826 = vmatpush1.msra.mxu0 %v779
          %827 = vmatprep.subr.mxu0 0.0
          %828 = vmatpush2.msra.mxu0 0.0
          %829 = vmatprep.subr.mxu0 0.0
          %830 = vmatpush2.msra.mxu0 0.0
          %831 = vmatprep.subr.mxu0 0.0
          %832 = vmatpush2.msra.mxu0 0.0
          %833 = vmatprep.subr.mxu0 0.0
          %834 = vmatpush2.msra.mxu0 0.0
          %835 = vmatprep.subr.mxu0 0.0
          %836 = vmatpush2.msra.mxu0 0.0
          %837 = vmatprep.subr.mxu0 0.0
          %838 = vmatpush2.msra.mxu0 0.0
          %839 = vmatprep.subr.mxu0 0.0
          %840 = vmatpush2.msra.mxu0 0.0
          %841 = vmatprep.subr.mxu0 0.0
          %842 = vmatpush2.msra.mxu0 0.0
          %843 = vmatprep.subr.mxu0 0.0
          %844 = vmatpush2.msra.mxu0 0.0
          %845 = vmatprep.subr.mxu0 0.0
          %846 = vmatpush2.msra.mxu0 0.0
          %847 = vmatprep.subr.mxu0 0.0
          %848 = vmatpush2.msra.mxu0 0.0
          %849 = vmatprep.subr.mxu0 0.0
          %850 = vmatpush2.msra.mxu0 0.0
          %851 = vmatprep.subr.mxu0 0.0
          %852 = vmatpush2.msra.mxu0 0.0
          %853 = vmatprep.subr.mxu0 0.0
          %854 = vmatpush2.msra.mxu0 0.0
          %855 = vmatprep.subr.mxu0 0.0
          %856 = vmatpush2.msra.mxu0 0.0
          %857 = vmatprep.subr.mxu0 0.0
          %858 = vmatpush2.msra.mxu0 0.0
          %859 = vmatprep.mubr.f32.mxu0 0.0
          %860 = vmatmul.mubr.f32.gmra.mxu0 %v763
          %v861 = vpop.f32.mrf.mxu0
          %v862 = vadd.f32 0.0, %v861
          %v863 = vpop.f32.mrf.mxu0
          %864 = vmatprep.mubr.f32.mxu0 0.0
          %865 = vmatmul.mubr.f32.gmra.mxu0 %v764
          %v866 = vpop.f32.mrf.mxu0
          %v867 = vadd.f32 0.0, %v866
          %v868 = vpop.f32.mrf.mxu0
          %869 = vmatprep.mubr.f32.mxu0 0.0
          %870 = vmatmul.mubr.f32.gmra.mxu0 %v765
          %v871 = vpop.f32.mrf.mxu0
          %v872 = vadd.f32 0.0, %v871
          %v873 = vpop.f32.mrf.mxu0
          %874 = vmatprep.mubr.f32.mxu0 0.0
          %875 = vmatmul.mubr.f32.gmra.mxu0 %v766
          %v876 = vpop.f32.mrf.mxu0
          %v877 = vadd.f32 0.0, %v876
          %v878 = vpop.f32.mrf.mxu0
          %879 = vmatprep.mubr.f32.mxu0 0.0
          %880 = vmatmul.mubr.f32.gmra.mxu0 %v767
          %v881 = vpop.f32.mrf.mxu0
          %v882 = vadd.f32 0.0, %v881
          %v883 = vpop.f32.mrf.mxu0
          %884 = vmatprep.mubr.f32.mxu0 0.0
          %885 = vmatmul.mubr.f32.gmra.mxu0 %v768
          %v886 = vpop.f32.mrf.mxu0
          %v887 = vadd.f32 0.0, %v886
          %v888 = vpop.f32.mrf.mxu0
          %889 = vmatprep.mubr.f32.mxu0 0.0
          %890 = vmatmul.mubr.f32.gmra.mxu0 %v769
          %v891 = vpop.f32.mrf.mxu0
          %v892 = vadd.f32 0.0, %v891
          %v893 = vpop.f32.mrf.mxu0
          %894 = vmatprep.mubr.f32.mxu0 0.0
          %895 = vmatmul.mubr.f32.gmra.mxu0 %v770
          %v896 = vpop.f32.mrf.mxu0
          %v897 = vadd.f32 0.0, %v896
          %v898 = vpop.f32.mrf.mxu0
          %899 = vmatprep.mubr.f32.mxu0 0.0
          %900 = vmatmul.mubr.f32.gmra.mxu0 %v771
          %v901 = vpop.f32.mrf.mxu0
          %v902 = vadd.f32 0.0, %v901
          %v903 = vpop.f32.mrf.mxu0
          %904 = vmatprep.mubr.f32.mxu0 0.0
          %905 = vmatmul.mubr.f32.gmra.mxu0 %v772
          %v906 = vpop.f32.mrf.mxu0
          %v907 = vadd.f32 0.0, %v906
          %v908 = vpop.f32.mrf.mxu0
          %909 = vmatprep.mubr.f32.mxu0 0.0
          %910 = vmatmul.mubr.f32.gmra.mxu0 %v773
          %v911 = vpop.f32.mrf.mxu0
          %v912 = vadd.f32 0.0, %v911
          %v913 = vpop.f32.mrf.mxu0
          %914 = vmatprep.mubr.f32.mxu0 0.0
          %915 = vmatmul.mubr.f32.gmra.mxu0 %v774
          %v916 = vpop.f32.mrf.mxu0
          %v917 = vadd.f32 0.0, %v916
          %v918 = vpop.f32.mrf.mxu0
          %919 = vmatprep.mubr.f32.mxu0 0.0
          %920 = vmatmul.mubr.f32.gmra.mxu0 %v775
          %v921 = vpop.f32.mrf.mxu0
          %v922 = vadd.f32 0.0, %v921
          %v923 = vpop.f32.mrf.mxu0
          %924 = vmatprep.mubr.f32.mxu0 0.0
          %925 = vmatmul.mubr.f32.gmra.mxu0 %v776
          %v926 = vpop.f32.mrf.mxu0
          %v927 = vadd.f32 0.0, %v926
          %v928 = vpop.f32.mrf.mxu0
          %929 = vmatprep.mubr.f32.mxu0 0.0
          %930 = vmatmul.mubr.f32.gmra.mxu0 %v777
          %v931 = vpop.f32.mrf.mxu0
          %v932 = vadd.f32 0.0, %v931
          %v933 = vpop.f32.mrf.mxu0
          %934 = vmatprep.mubr.f32.mxu0 0.0
          %935 = vmatmul.mubr.f32.gmra.mxu0 %v778
          %v936 = vpop.f32.mrf.mxu0
          %v937 = vadd.f32 0.0, %v936
          %v938 = vpop.f32.mrf.mxu0
          %939 = vdwg.mxu0
          %s940 = scalar_lea.vmem [#allocation3], %s376
          %941 = vst [vmem:[%s940] sm:$0xff] %v862
          %942 = vst [vmem:[%s940 + $0x8] sm:$0xff] %v867
          %943 = vst [vmem:[%s940 + $0x10] sm:$0xff] %v872
          %944 = vst [vmem:[%s940 + $0x18] sm:$0xff] %v877
          %945 = vst [vmem:[%s940 + $0x20] sm:$0xff] %v882
          %946 = vst [vmem:[%s940 + $0x28] sm:$0xff] %v887
          %947 = vst [vmem:[%s940 + $0x30] sm:$0xff] %v892
          %948 = vst [vmem:[%s940 + $0x38] sm:$0xff] %v897
          %949 = vst [vmem:[%s940 + $0x40] sm:$0xff] %v902
          %950 = vst [vmem:[%s940 + $0x48] sm:$0xff] %v907
          %951 = vst [vmem:[%s940 + $0x50] sm:$0xff] %v912
          %952 = vst [vmem:[%s940 + $0x58] sm:$0xff] %v917
          %953 = vst [vmem:[%s940 + $0x60] sm:$0xff] %v922
          %954 = vst [vmem:[%s940 + $0x68] sm:$0xff] %v927
          %955 = vst [vmem:[%s940 + $0x70] sm:$0xff] %v932
          %956 = vst [vmem:[%s940 + $0x78] sm:$0xff] %v937
        $region68: #{tpu_custom_call.1} parent=43 // pred_fallthru
          _
        %p957 = scmp.eq.s32.totalorder %s31, 2
        // Predicated region
        $region69: #{tpu_custom_call.1} parent=43 // pred_check
          %p958 = pneg %p957
        $region70: #{tpu_custom_call.1} parent=43 // pred_check_branch
          %960 = sbr.rel (%p958) target = $region72
        $region71: #{tpu_custom_call.1} parent=43 // pred_region
          %v961 = vld [vmem:[%s325] sm:$0xff]
          %v962 = vld [vmem:[%s325 + $0x8] sm:$0xff]
          %v963 = vld [vmem:[%s325 + $0x10] sm:$0xff]
          %v964 = vld [vmem:[%s325 + $0x18] sm:$0xff]
          %v965 = vld [vmem:[%s325 + $0x20] sm:$0xff]
          %v966 = vld [vmem:[%s325 + $0x28] sm:$0xff]
          %v967 = vld [vmem:[%s325 + $0x30] sm:$0xff]
          %v968 = vld [vmem:[%s325 + $0x38] sm:$0xff]
          %v969 = vld [vmem:[%s325 + $0x40] sm:$0xff]
          %v970 = vld [vmem:[%s325 + $0x48] sm:$0xff]
          %v971 = vld [vmem:[%s325 + $0x50] sm:$0xff]
          %v972 = vld [vmem:[%s325 + $0x58] sm:$0xff]
          %v973 = vld [vmem:[%s325 + $0x60] sm:$0xff]
          %v974 = vld [vmem:[%s325 + $0x68] sm:$0xff]
          %v975 = vld [vmem:[%s325 + $0x70] sm:$0xff]
          %v976 = vld [vmem:[%s325 + $0x78] sm:$0xff]
          %v977 = vld [vmem:[#allocation3] sm:$0xff]
          %v978 = vld [vmem:[#allocation3 + $0x8] sm:$0xff]
          %v979 = vld [vmem:[#allocation3 + $0x10] sm:$0xff]
          %v980 = vld [vmem:[#allocation3 + $0x18] sm:$0xff]
          %v981 = vld [vmem:[#allocation3 + $0x20] sm:$0xff]
          %v982 = vld [vmem:[#allocation3 + $0x28] sm:$0xff]
          %v983 = vld [vmem:[#allocation3 + $0x30] sm:$0xff]
          %v984 = vld [vmem:[#allocation3 + $0x38] sm:$0xff]
          %v985 = vld [vmem:[#allocation3 + $0x40] sm:$0xff]
          %v986 = vld [vmem:[#allocation3 + $0x48] sm:$0xff]
          %v987 = vld [vmem:[#allocation3 + $0x50] sm:$0xff]
          %v988 = vld [vmem:[#allocation3 + $0x58] sm:$0xff]
          %v989 = vld [vmem:[#allocation3 + $0x60] sm:$0xff]
          %v990 = vld [vmem:[#allocation3 + $0x68] sm:$0xff]
          %v991 = vld [vmem:[#allocation3 + $0x70] sm:$0xff]
          %v992 = vld [vmem:[#allocation3 + $0x78] sm:$0xff]
          %v993 = vld [vmem:[%s5] sm:$0x1]
          %v995 = vlaneseq
          %v996 = vshrl.u32 %v995, 7
          %v997 = vsub.s32 0, %v996
          %v998 = vrot.slane %v993, %v997
          %1000 = vmatprep.subr.mxu0 0.0
          %1001 = vmatpush1.msra.mxu0 %v992
          %1002 = vmatprep.subr.mxu0 0.0
          %1003 = vmatpush1.msra.mxu0 %v991
          %1004 = vmatprep.subr.mxu0 0.0
          %1005 = vmatpush1.msra.mxu0 %v990
          %1006 = vmatprep.subr.mxu0 0.0
          %1007 = vmatpush1.msra.mxu0 %v989
          %1008 = vmatprep.subr.mxu0 0.0
          %1009 = vmatpush1.msra.mxu0 %v988
          %1010 = vmatprep.subr.mxu0 0.0
          %1011 = vmatpush1.msra.mxu0 %v987
          %1012 = vmatprep.subr.mxu0 0.0
          %1013 = vmatpush1.msra.mxu0 %v986
          %1014 = vmatprep.subr.mxu0 0.0
          %1015 = vmatpush1.msra.mxu0 %v985
          %1016 = vmatprep.subr.mxu0 0.0
          %1017 = vmatpush1.msra.mxu0 %v984
          %1018 = vmatprep.subr.mxu0 0.0
          %1019 = vmatpush1.msra.mxu0 %v983
          %1020 = vmatprep.subr.mxu0 0.0
          %1021 = vmatpush1.msra.mxu0 %v982
          %1022 = vmatprep.subr.mxu0 0.0
          %1023 = vmatpush1.msra.mxu0 %v981
          %1024 = vmatprep.subr.mxu0 0.0
          %1025 = vmatpush1.msra.mxu0 %v980
          %1026 = vmatprep.subr.mxu0 0.0
          %1027 = vmatpush1.msra.mxu0 %v979
          %1028 = vmatprep.subr.mxu0 0.0
          %1029 = vmatpush1.msra.mxu0 %v978
          %1030 = vmatprep.subr.mxu0 0.0
          %1031 = vmatpush1.msra.mxu0 %v977
          %1032 = vmatprep.subr.mxu0 0.0
          %1033 = vmatpush2.msra.mxu0 0.0
          %1034 = vmatprep.subr.mxu0 0.0
          %1035 = vmatpush2.msra.mxu0 0.0
          %1036 = vmatprep.subr.mxu0 0.0
          %1037 = vmatpush2.msra.mxu0 0.0
          %1038 = vmatprep.subr.mxu0 0.0
          %1039 = vmatpush2.msra.mxu0 0.0
          %1040 = vmatprep.subr.mxu0 0.0
          %1041 = vmatpush2.msra.mxu0 0.0
          %1042 = vmatprep.subr.mxu0 0.0
          %1043 = vmatpush2.msra.mxu0 0.0
          %1044 = vmatprep.subr.mxu0 0.0
          %1045 = vmatpush2.msra.mxu0 0.0
          %1046 = vmatprep.subr.mxu0 0.0
          %1047 = vmatpush2.msra.mxu0 0.0
          %1048 = vmatprep.subr.mxu0 0.0
          %1049 = vmatpush2.msra.mxu0 0.0
          %1050 = vmatprep.subr.mxu0 0.0
          %1051 = vmatpush2.msra.mxu0 0.0
          %1052 = vmatprep.subr.mxu0 0.0
          %1053 = vmatpush2.msra.mxu0 0.0
          %1054 = vmatprep.subr.mxu0 0.0
          %1055 = vmatpush2.msra.mxu0 0.0
          %1056 = vmatprep.subr.mxu0 0.0
          %1057 = vmatpush2.msra.mxu0 0.0
          %1058 = vmatprep.subr.mxu0 0.0
          %1059 = vmatpush2.msra.mxu0 0.0
          %1060 = vmatprep.subr.mxu0 0.0
          %1061 = vmatpush2.msra.mxu0 0.0
          %1062 = vmatprep.subr.mxu0 0.0
          %1063 = vmatpush2.msra.mxu0 0.0
          %1064 = vmatprep.mubr.f32.mxu0 0.0
          %1065 = vmatmul.mubr.f32.gmra.mxu0 %v961
          %v1066 = vpop.f32.mrf.mxu0
          %v1067 = vadd.f32 %v998, %v1066
          %v1068 = vpop.f32.mrf.mxu0
          %1069 = vmatprep.mubr.f32.mxu0 0.0
          %1070 = vmatmul.mubr.f32.gmra.mxu0 %v962
          %v1071 = vpop.f32.mrf.mxu0
          %v1072 = vadd.f32 %v998, %v1071
          %v1073 = vpop.f32.mrf.mxu0
          %1074 = vmatprep.mubr.f32.mxu0 0.0
          %1075 = vmatmul.mubr.f32.gmra.mxu0 %v963
          %v1076 = vpop.f32.mrf.mxu0
          %v1077 = vadd.f32 %v998, %v1076
          %v1078 = vpop.f32.mrf.mxu0
          %1079 = vmatprep.mubr.f32.mxu0 0.0
          %1080 = vmatmul.mubr.f32.gmra.mxu0 %v964
          %v1081 = vpop.f32.mrf.mxu0
          %v1082 = vadd.f32 %v998, %v1081
          %v1083 = vpop.f32.mrf.mxu0
          %1084 = vmatprep.mubr.f32.mxu0 0.0
          %1085 = vmatmul.mubr.f32.gmra.mxu0 %v965
          %v1086 = vpop.f32.mrf.mxu0
          %v1087 = vadd.f32 %v998, %v1086
          %v1088 = vpop.f32.mrf.mxu0
          %1089 = vmatprep.mubr.f32.mxu0 0.0
          %1090 = vmatmul.mubr.f32.gmra.mxu0 %v966
          %v1091 = vpop.f32.mrf.mxu0
          %v1092 = vadd.f32 %v998, %v1091
          %v1093 = vpop.f32.mrf.mxu0
          %1094 = vmatprep.mubr.f32.mxu0 0.0
          %1095 = vmatmul.mubr.f32.gmra.mxu0 %v967
          %v1096 = vpop.f32.mrf.mxu0
          %v1097 = vadd.f32 %v998, %v1096
          %v1098 = vpop.f32.mrf.mxu0
          %1099 = vmatprep.mubr.f32.mxu0 0.0
          %1100 = vmatmul.mubr.f32.gmra.mxu0 %v968
          %v1101 = vpop.f32.mrf.mxu0
          %v1102 = vadd.f32 %v998, %v1101
          %v1103 = vpop.f32.mrf.mxu0
          %1104 = vmatprep.mubr.f32.mxu0 0.0
          %1105 = vmatmul.mubr.f32.gmra.mxu0 %v969
          %v1106 = vpop.f32.mrf.mxu0
          %v1107 = vadd.f32 %v998, %v1106
          %v1108 = vpop.f32.mrf.mxu0
          %1109 = vmatprep.mubr.f32.mxu0 0.0
          %1110 = vmatmul.mubr.f32.gmra.mxu0 %v970
          %v1111 = vpop.f32.mrf.mxu0
          %v1112 = vadd.f32 %v998, %v1111
          %v1113 = vpop.f32.mrf.mxu0
          %1114 = vmatprep.mubr.f32.mxu0 0.0
          %1115 = vmatmul.mubr.f32.gmra.mxu0 %v971
          %v1116 = vpop.f32.mrf.mxu0
          %v1117 = vadd.f32 %v998, %v1116
          %v1118 = vpop.f32.mrf.mxu0
          %1119 = vmatprep.mubr.f32.mxu0 0.0
          %1120 = vmatmul.mubr.f32.gmra.mxu0 %v972
          %v1121 = vpop.f32.mrf.mxu0
          %v1122 = vadd.f32 %v998, %v1121
          %v1123 = vpop.f32.mrf.mxu0
          %1124 = vmatprep.mubr.f32.mxu0 0.0
          %1125 = vmatmul.mubr.f32.gmra.mxu0 %v973
          %v1126 = vpop.f32.mrf.mxu0
          %v1127 = vadd.f32 %v998, %v1126
          %v1128 = vpop.f32.mrf.mxu0
          %1129 = vmatprep.mubr.f32.mxu0 0.0
          %1130 = vmatmul.mubr.f32.gmra.mxu0 %v974
          %v1131 = vpop.f32.mrf.mxu0
          %v1132 = vadd.f32 %v998, %v1131
          %v1133 = vpop.f32.mrf.mxu0
          %1134 = vmatprep.mubr.f32.mxu0 0.0
          %1135 = vmatmul.mubr.f32.gmra.mxu0 %v975
          %v1136 = vpop.f32.mrf.mxu0
          %v1137 = vadd.f32 %v998, %v1136
          %v1138 = vpop.f32.mrf.mxu0
          %1139 = vmatprep.mubr.f32.mxu0 0.0
          %1140 = vmatmul.mubr.f32.gmra.mxu0 %v976
          %v1141 = vpop.f32.mrf.mxu0
          %v1142 = vadd.f32 %v998, %v1141
          %v1143 = vpop.f32.mrf.mxu0
          %1144 = vdwg.mxu0
          %v1145 = vlaneseq
          %v1146 = vand.u32 %v1145, 127
          %vm1147 = vcmp.lt.s32.totalorder %v1146, 8
          %v1148 = vsel %vm1147, %v1067, -1e+30
          %v1149 = vsel %vm1147, %v1072, -1e+30
          %v1150 = vsel %vm1147, %v1077, -1e+30
          %v1151 = vsel %vm1147, %v1082, -1e+30
          %v1152 = vsel %vm1147, %v1087, -1e+30
          %v1153 = vsel %vm1147, %v1092, -1e+30
          %v1154 = vsel %vm1147, %v1097, -1e+30
          %v1155 = vsel %vm1147, %v1102, -1e+30
          %v1156 = vsel %vm1147, %v1107, -1e+30
          %v1157 = vsel %vm1147, %v1112, -1e+30
          %v1158 = vsel %vm1147, %v1117, -1e+30
          %v1159 = vsel %vm1147, %v1122, -1e+30
          %v1160 = vsel %vm1147, %v1127, -1e+30
          %v1161 = vsel %vm1147, %v1132, -1e+30
          %v1162 = vsel %vm1147, %v1137, -1e+30
          %v1163 = vsel %vm1147, %v1142, -1e+30
          %1164 = vmax.xlane.f32.xlu0 %v1148
          %v1165 = vpop.xlane.xlu0 %1164
          %1166 = vmax.xlane.f32.xlu0 %v1149
          %v1167 = vpop.xlane.xlu0 %1166
          %1168 = vmax.xlane.f32.xlu0 %v1150
          %v1169 = vpop.xlane.xlu0 %1168
          %1170 = vmax.xlane.f32.xlu0 %v1151
          %v1171 = vpop.xlane.xlu0 %1170
          %1172 = vmax.xlane.f32.xlu0 %v1152
          %v1173 = vpop.xlane.xlu0 %1172
          %1174 = vmax.xlane.f32.xlu0 %v1153
          %v1175 = vpop.xlane.xlu0 %1174
          %1176 = vmax.xlane.f32.xlu0 %v1154
          %v1177 = vpop.xlane.xlu0 %1176
          %1178 = vmax.xlane.f32.xlu0 %v1155
          %v1179 = vpop.xlane.xlu0 %1178
          %1180 = vmax.xlane.f32.xlu0 %v1156
          %v1181 = vpop.xlane.xlu0 %1180
          %1182 = vmax.xlane.f32.xlu0 %v1157
          %v1183 = vpop.xlane.xlu0 %1182
          %1184 = vmax.xlane.f32.xlu0 %v1158
          %v1185 = vpop.xlane.xlu0 %1184
          %1186 = vmax.xlane.f32.xlu0 %v1159
          %v1187 = vpop.xlane.xlu0 %1186
          %1188 = vmax.xlane.f32.xlu0 %v1160
          %v1189 = vpop.xlane.xlu0 %1188
          %1190 = vmax.xlane.f32.xlu0 %v1161
          %v1191 = vpop.xlane.xlu0 %1190
          %1192 = vmax.xlane.f32.xlu0 %v1162
          %v1193 = vpop.xlane.xlu0 %1192
          %1194 = vmax.xlane.f32.xlu0 %v1163
          %v1195 = vpop.xlane.xlu0 %1194
          %v1196 = vsub.f32 %v1148, %v1165
          %v1197 = vsub.f32 %v1149, %v1167
          %v1198 = vsub.f32 %v1150, %v1169
          %v1199 = vsub.f32 %v1151, %v1171
          %v1200 = vsub.f32 %v1152, %v1173
          %v1201 = vsub.f32 %v1153, %v1175
          %v1202 = vsub.f32 %v1154, %v1177
          %v1203 = vsub.f32 %v1155, %v1179
          %v1204 = vsub.f32 %v1156, %v1181
          %v1205 = vsub.f32 %v1157, %v1183
          %v1206 = vsub.f32 %v1158, %v1185
          %v1207 = vsub.f32 %v1159, %v1187
          %v1208 = vsub.f32 %v1160, %v1189
          %v1209 = vsub.f32 %v1161, %v1191
          %v1210 = vsub.f32 %v1162, %v1193
          %v1211 = vsub.f32 %v1163, %v1195
          %v1212 = vmul.f32 %v1196, 1.442695
          %v1213 = vpow.pop %v1212
          %v1214 = vmul.f32 %v1197, 1.442695
          %v1215 = vpow.pop %v1214
          %v1216 = vmul.f32 %v1198, 1.442695
          %v1217 = vpow.pop %v1216
          %v1218 = vmul.f32 %v1199, 1.442695
          %v1219 = vpow.pop %v1218
          %v1220 = vmul.f32 %v1200, 1.442695
          %v1221 = vpow.pop %v1220
          %v1222 = vmul.f32 %v1201, 1.442695
          %v1223 = vpow.pop %v1222
          %v1224 = vmul.f32 %v1202, 1.442695
          %v1225 = vpow.pop %v1224
          %v1226 = vmul.f32 %v1203, 1.442695
          %v1227 = vpow.pop %v1226
          %v1228 = vmul.f32 %v1204, 1.442695
          %v1229 = vpow.pop %v1228
          %v1230 = vmul.f32 %v1205, 1.442695
          %v1231 = vpow.pop %v1230
          %v1232 = vmul.f32 %v1206, 1.442695
          %v1233 = vpow.pop %v1232
          %v1234 = vmul.f32 %v1207, 1.442695
          %v1235 = vpow.pop %v1234
          %v1236 = vmul.f32 %v1208, 1.442695
          %v1237 = vpow.pop %v1236
          %v1238 = vmul.f32 %v1209, 1.442695
          %v1239 = vpow.pop %v1238
          %v1240 = vmul.f32 %v1210, 1.442695
          %v1241 = vpow.pop %v1240
          %v1242 = vmul.f32 %v1211, 1.442695
          %v1243 = vpow.pop %v1242
          %1244 = vadd.xlane.f32.xlu0 %v1213
          %v1245 = vpop.xlane.xlu0 %1244
          %1246 = vadd.xlane.f32.xlu0 %v1215
          %v1247 = vpop.xlane.xlu0 %1246
          %1248 = vadd.xlane.f32.xlu0 %v1217
          %v1249 = vpop.xlane.xlu0 %1248
          %1250 = vadd.xlane.f32.xlu0 %v1219
          %v1251 = vpop.xlane.xlu0 %1250
          %1252 = vadd.xlane.f32.xlu0 %v1221
          %v1253 = vpop.xlane.xlu0 %1252
          %1254 = vadd.xlane.f32.xlu0 %v1223
          %v1255 = vpop.xlane.xlu0 %1254
          %1256 = vadd.xlane.f32.xlu0 %v1225
          %v1257 = vpop.xlane.xlu0 %1256
          %1258 = vadd.xlane.f32.xlu0 %v1227
          %v1259 = vpop.xlane.xlu0 %1258
          %1260 = vadd.xlane.f32.xlu0 %v1229
          %v1261 = vpop.xlane.xlu0 %1260
          %1262 = vadd.xlane.f32.xlu0 %v1231
          %v1263 = vpop.xlane.xlu0 %1262
          %1264 = vadd.xlane.f32.xlu0 %v1233
          %v1265 = vpop.xlane.xlu0 %1264
          %1266 = vadd.xlane.f32.xlu0 %v1235
          %v1267 = vpop.xlane.xlu0 %1266
          %1268 = vadd.xlane.f32.xlu0 %v1237
          %v1269 = vpop.xlane.xlu0 %1268
          %1270 = vadd.xlane.f32.xlu0 %v1239
          %v1271 = vpop.xlane.xlu0 %1270
          %1272 = vadd.xlane.f32.xlu0 %v1241
          %v1273 = vpop.xlane.xlu0 %1272
          %1274 = vadd.xlane.f32.xlu0 %v1243
          %v1275 = vpop.xlane.xlu0 %1274
          %v1276 = vlog2.pop %v1245
          %v1277 = vmul.f32 %v1276, 0.6931472
          %v1278 = vlog2.pop %v1247
          %v1279 = vmul.f32 %v1278, 0.6931472
          %v1280 = vlog2.pop %v1249
          %v1281 = vmul.f32 %v1280, 0.6931472
          %v1282 = vlog2.pop %v1251
          %v1283 = vmul.f32 %v1282, 0.6931472
          %v1284 = vlog2.pop %v1253
          %v1285 = vmul.f32 %v1284, 0.6931472
          %v1286 = vlog2.pop %v1255
          %v1287 = vmul.f32 %v1286, 0.6931472
          %v1288 = vlog2.pop %v1257
          %v1289 = vmul.f32 %v1288, 0.6931472
          %v1290 = vlog2.pop %v1259
          %v1291 = vmul.f32 %v1290, 0.6931472
          %v1292 = vlog2.pop %v1261
          %v1293 = vmul.f32 %v1292, 0.6931472
          %v1294 = vlog2.pop %v1263
          %v1295 = vmul.f32 %v1294, 0.6931472
          %v1296 = vlog2.pop %v1265
          %v1297 = vmul.f32 %v1296, 0.6931472
          %v1298 = vlog2.pop %v1267
          %v1299 = vmul.f32 %v1298, 0.6931472
          %v1300 = vlog2.pop %v1269
          %v1301 = vmul.f32 %v1300, 0.6931472
          %v1302 = vlog2.pop %v1271
          %v1303 = vmul.f32 %v1302, 0.6931472
          %v1304 = vlog2.pop %v1273
          %v1305 = vmul.f32 %v1304, 0.6931472
          %v1306 = vlog2.pop %v1275
          %v1307 = vmul.f32 %v1306, 0.6931472
          %v1308 = vsub.f32 %v1196, %v1277
          %v1309 = vsub.f32 %v1197, %v1279
          %v1310 = vsub.f32 %v1198, %v1281
          %v1311 = vsub.f32 %v1199, %v1283
          %v1312 = vsub.f32 %v1200, %v1285
          %v1313 = vsub.f32 %v1201, %v1287
          %v1314 = vsub.f32 %v1202, %v1289
          %v1315 = vsub.f32 %v1203, %v1291
          %v1316 = vsub.f32 %v1204, %v1293
          %v1317 = vsub.f32 %v1205, %v1295
          %v1318 = vsub.f32 %v1206, %v1297
          %v1319 = vsub.f32 %v1207, %v1299
          %v1320 = vsub.f32 %v1208, %v1301
          %v1321 = vsub.f32 %v1209, %v1303
          %v1322 = vsub.f32 %v1210, %v1305
          %v1323 = vsub.f32 %v1211, %v1307
          %1324 = vst [vmem:[%s366] sm:$0xff] %v1308
          %1325 = vst [vmem:[%s366 + $0x8] sm:$0xff] %v1309
          %1326 = vst [vmem:[%s366 + $0x10] sm:$0xff] %v1310
          %1327 = vst [vmem:[%s366 + $0x18] sm:$0xff] %v1311
          %1328 = vst [vmem:[%s366 + $0x20] sm:$0xff] %v1312
          %1329 = vst [vmem:[%s366 + $0x28] sm:$0xff] %v1313
          %1330 = vst [vmem:[%s366 + $0x30] sm:$0xff] %v1314
          %1331 = vst [vmem:[%s366 + $0x38] sm:$0xff] %v1315
          %1332 = vst [vmem:[%s366 + $0x40] sm:$0xff] %v1316
          %1333 = vst [vmem:[%s366 + $0x48] sm:$0xff] %v1317
          %1334 = vst [vmem:[%s366 + $0x50] sm:$0xff] %v1318
          %1335 = vst [vmem:[%s366 + $0x58] sm:$0xff] %v1319
          %1336 = vst [vmem:[%s366 + $0x60] sm:$0xff] %v1320
          %1337 = vst [vmem:[%s366 + $0x68] sm:$0xff] %v1321
          %1338 = vst [vmem:[%s366 + $0x70] sm:$0xff] %v1322
          %1339 = vst [vmem:[%s366 + $0x78] sm:$0xff] %v1323
        $region72: #{tpu_custom_call.1} parent=43 // pred_fallthru
          _
        %s1340 = sand.u32 %s195, 1
        %s1341 = scalar_lea.sflag [#allocation6], %s1340
        %s1342 = sand.u32 %s195, 1
        %s1343 = smul.addr %s1342, 128
        %s1344 = scalar_lea.vmem [#allocation12], %s1343
        // Predicated region
        $region73: #{tpu_custom_call.1} parent=43 // pred_check
          %p1345 = pneg %p205
        $region74: #{tpu_custom_call.1} parent=43 // pred_check_branch
          %1347 = sbr.rel (%p1345) target = $region76
        $region75: #{tpu_custom_call.1} parent=43 // pred_region
          %p1348 = scmp.eq.s32.totalorder %s31, 2
          %s1349 = scalar_select %p1348, %s32, 0
          %s1350 = smul.u32 16, %s1349
          %s1352 = ssub.s32 2048, 2048
          %1353 = vsyncadd %s1341, %s1352
          %s1354 = smul.addr %s1350, 128
          %s1355 = scalar_lea.hbm %s6, %s1354
          %s1356 = sshll.u32 %s1344, 4
          %s1357 = int_to_ptr.vmem [resolvable:$true] %s1356
          %1362 = dma.vmem_to_hbm [thread:$0]  %s1357, 2048, %s1355, %s1341, 128, 128, 8
        $region76: #{tpu_custom_call.1} parent=43 // pred_fallthru
          _
      $region44: #{tpu_custom_call.1} parent=5 // pred_fallthru
        _
      %p1363 = scmp.le.s32.totalorder 2, %s22
      // Predicated region
      $region77: #{tpu_custom_call.1} parent=5 // pred_check
        %p1364 = pneg %p1363
      $region78: #{tpu_custom_call.1} parent=5 // pred_check_branch
        %1366 = sbr.rel (%p1364) target = $region80
      $region79: #{tpu_custom_call.1} parent=5 // pred_region
        %s1367 = ssub.s32 %s22, 2
        // Predicated region
        $region81: #{tpu_custom_call.1} parent=79 // pred_check
          %p1368 = pneg %p211
        $region82: #{tpu_custom_call.1} parent=79 // pred_check_branch
          %1370 = sbr.rel (%p1368) target = $region84
        $region83: #{tpu_custom_call.1} parent=79 // pred_region
          %s1371 = sand.u32 %s196, 1
          %s1372 = scalar_lea.sflag [#allocation6], %s1371
          %s1373 = sand.u32 %s196, 1
          %s1374 = smul.addr %s1373, 128
          %s1375 = scalar_lea.vmem [#allocation12], %s1374
          %1376 = dma.done %s1372, 2048
        $region84: #{tpu_custom_call.1} parent=79 // pred_fallthru
          _
      $region80: #{tpu_custom_call.1} parent=5 // pred_fallthru
        _
    $region6: #{tpu_custom_call.1} parent=1 // loop_footer
      %s26 = sadd.s32 1, %s22
    $region7: #{tpu_custom_call.1} parent=1 // loop_footer_branch
      %21 = sbr.rel target = $region3
    $region8: #{tpu_custom_call.1} parent=1 // loop_exit
      _
    %1377 = vsyncpa [#allocation5], 1
    %s1378 = scalar_lea.sflag [#allocation5], 1
    %1379 = vsyncpa %s1378, 1
    %1380 = vsyncpa [#allocation8], 1
    %s1381 = scalar_lea.sflag [#allocation8], 1
    %1382 = vsyncpa %s1381, 1
    %1383 = vsyncpa [#allocation11], 1
    %1384 = vsyncpa [#allocation6], 1
    %s1385 = scalar_lea.sflag [#allocation6], 1
    %1386 = vsyncpa %s1385, 1

</llo_original>
